<compile_context>
chip_gen: v5e
topology: v5e:2x2
jax: 0.10.0
libtpu: 0.0.40
codegen_flags: <defaults>
</compile_context>

<pallas_src>
import functools

import jax
import jax.numpy as jnp
from jax import lax
from jax.experimental import pallas as pl
from jax.experimental.pallas import tpu as pltpu


# ----------------------------- Pallas kernel ------------------------------- #
def _encoder_layer_kernel(
    x_ref,        # (1, S, E)   f32   input activations (read only at layer 0)
    wqkv_ref,     # (1, E, 3E)  bf16  in_proj_weight, pre-transposed
    bqkv_ref,     # (1, 1, 3E)  f32
    wo_ref,       # (1, E, E)   bf16  out_proj.weight, pre-transposed
    bo_ref,       # (1, 1, E)   f32
    w1_ref,       # (1, E, F)   bf16  linear1.weight, pre-transposed
    b1_ref,       # (1, 1, F)   f32
    w2_ref,       # (1, F, E)   bf16  linear2.weight, pre-transposed
    b2_ref,       # (1, 1, E)   f32
    ln1w_ref,     # (1, 1, E)   f32
    ln1b_ref,     # (1, 1, E)   f32
    ln2w_ref,     # (1, 1, E)   f32
    ln2b_ref,     # (1, 1, E)   f32
    o_ref,        # (1, S, E)   f32   resident across the layer grid axis
    *,
    num_heads: int,
    eps: float = 1e-5,
):
    layer = pl.program_id(1)

    # Seed the carried activation with the kernel input on the first layer.
    @pl.when(layer == 0)
    def _():
        o_ref[...] = x_ref[...]

    S = o_ref.shape[1]
    E = o_ref.shape[2]
    H = num_heads
    Dh = E // H
    scale = 1.0 / (Dh ** 0.5)
    cdt = wqkv_ref.dtype                      # matmul compute dtype (bf16)

    x = o_ref[0]                              # (S, E) f32 -- previous layer's output

    def layer_norm(h, w, b):
        mu = jnp.mean(h, axis=-1, keepdims=True)
        d = h - mu
        var = jnp.mean(d * d, axis=-1, keepdims=True)
        return d * lax.rsqrt(var + eps) * w + b

    # ---- QKV projection: one lane-dense GEMM (bf16 in, f32 acc) ----
    qkv = jnp.dot(x.astype(cdt), wqkv_ref[0],
                  preferred_element_type=jnp.float32) + bqkv_ref[0]   # (S, 3E)

    # ---- per-head attention (bf16 matmuls, f32 softmax) ----
    ctx_heads = []
    for h in range(H):
        q_h = (qkv[:, h * Dh:(h + 1) * Dh] * scale).astype(cdt)       # (S, Dh)
        k_h = qkv[:, E + h * Dh:E + (h + 1) * Dh].astype(cdt)
        v_h = qkv[:, 2 * E + h * Dh:2 * E + (h + 1) * Dh].astype(cdt)
        s = jnp.dot(q_h, k_h.T, preferred_element_type=jnp.float32)   # (S, S)
        m = jnp.max(s, axis=-1, keepdims=True)
        e = jnp.exp(s - m)
        p = e * pl.reciprocal(jnp.sum(e, axis=-1, keepdims=True), approx=True)
        ctx_heads.append(jnp.dot(p.astype(cdt), v_h,
                                 preferred_element_type=jnp.float32))  # (S, Dh)
    ctx = jnp.concatenate(ctx_heads, axis=-1)                          # (S, E)

    # ---- output projection: single (E,E) GEMM ----
    attn = jnp.dot(ctx.astype(cdt), wo_ref[0],
                   preferred_element_type=jnp.float32) + bo_ref[0]     # (S, E)

    # ---- residual + LayerNorm 1 (post-norm) ----
    h1 = layer_norm(x + attn, ln1w_ref[0], ln1b_ref[0])

    # ---- feed-forward (ReLU), bf16 matmuls with f32 accumulation ----
    ff = jnp.dot(h1.astype(cdt), w1_ref[0],
                 preferred_element_type=jnp.float32) + b1_ref[0]
    ff = jnp.maximum(ff, 0.0)
    ff = jnp.dot(ff.astype(cdt), w2_ref[0],
                 preferred_element_type=jnp.float32) + b2_ref[0]

    # ---- residual + LayerNorm 2, leave resident for next layer ----
    o_ref[0] = layer_norm(h1 + ff, ln2w_ref[0], ln2b_ref[0])


# ------------------------- host-side weight packing ------------------------- #
def _pack_params(layer_params, compute_dtype=jnp.bfloat16):
    """Pre-transpose PyTorch-style weights (host side, free) and stack over layers."""
    def per_layer(p):
        return (
            p["wqkv"].T.astype(compute_dtype),   # (E, 3E)
            p["bqkv"],                           # (1, 3E)
            p["wo"].T.astype(compute_dtype),     # (E, E)
            p["bo"],                             # (1, E)
            p["w1"].T.astype(compute_dtype),     # (E, F)
            p["b1"],                             # (1, F)
            p["w2"].T.astype(compute_dtype),     # (F, E)
            p["b2"],                             # (1, E)
            p["ln1w"], p["ln1b"], p["ln2w"], p["ln2b"],
        )

    packed = [per_layer(p) for p in layer_params]
    return tuple(jnp.stack(ws) for ws in zip(*packed))   # each (L, ...)


# --------------------------------- wrapper ---------------------------------- #
def temporal_transformer_encoder(x, layer_params, num_heads,
                                 compute_dtype=jnp.bfloat16):
    B, S, E = x.shape
    L = len(layer_params)
    F = layer_params[0]["w1"].shape[0]
    assert E % num_heads == 0
    Dh = E // num_heads

    packed = _pack_params(layer_params, compute_dtype)

    kernel = functools.partial(_encoder_layer_kernel, num_heads=num_heads)

    # x / output: one batch element per grid step, carried across the layer axis.
    x_spec = pl.BlockSpec((1, S, E), lambda b, l: (b, 0, 0))
    out_spec = pl.BlockSpec((1, S, E), lambda b, l: (b, 0, 0))

    def layer_spec(w):  # per-layer weight block, indexed by the layer grid axis
        return pl.BlockSpec((1, w.shape[1], w.shape[2]), lambda b, l: (l, 0, 0))

    in_specs = [x_spec] + [layer_spec(w) for w in packed]

    # Advisory cost estimate (2 layers, whole batch).
    flops = int(B * L * (6 * S * E * E        # QKV
                         + 4 * S * S * E      # QK^T + PV
                         + 2 * S * E * E      # out proj
                         + 4 * S * E * F))    # FFN
    transcendentals = int(B * L * num_heads * S * S)
    bytes_accessed = int(2 * B * S * E * 4
                         + sum(w.size * w.dtype.itemsize for w in packed))

    out = pl.pallas_call(
        kernel,
        out_shape=jax.ShapeDtypeStruct((B, S, E), jnp.float32),
        grid_spec=pltpu.PrefetchScalarGridSpec(
            num_scalar_prefetch=0,
            grid=(B, L),
            in_specs=in_specs,
            out_specs=out_spec,
        ),
        compiler_params=pltpu.CompilerParams(
            dimension_semantics=("parallel", "arbitrary"),
            vmem_limit_bytes=48 * 1024 * 1024,   # fits v7x (64 MiB) / raises v5e/v6e defaults
        ),
        cost_estimate=pl.CostEstimate(
            flops=flops,
            transcendentals=transcendentals,
            bytes_accessed=bytes_accessed),
    )(x, *packed)
    return out


# -------------------------- pure-JAX f32 reference -------------------------- #
def _ref_layer(x, p, num_heads, eps=1e-5):
    B, S, E = x.shape
    Dh = E // num_heads
    qkv = jnp.einsum("bse,fe->bsf", x, p["wqkv"]) + p["bqkv"][0]
    q, k, v = qkv[..., :E], qkv[..., E:2 * E], qkv[..., 2 * E:]

    def split(t):
        return t.reshape(B, S, num_heads, Dh).transpose(0, 2, 1, 3)  # (B,H,S,Dh)

    q, k, v = split(q) / (Dh ** 0.5), split(k), split(v)
    s = jnp.einsum("bhqd,bhkd->bhqk", q, k)
    p_attn = jax.nn.softmax(s, axis=-1)
    o = jnp.einsum("bhqk,bhkd->bhqd", p_attn, v).transpose(0, 2, 1, 3).reshape(B, S, E)
    o = jnp.einsum("bse,fe->bsf", o, p["wo"]) + p["bo"][0]

    def ln(h, w, b):
        mu = jnp.mean(h, axis=-1, keepdims=True)
        var = jnp.mean((h - mu) ** 2, axis=-1, keepdims=True)
        return (h - mu) * lax.rsqrt(var + eps) * w[0] + b[0]

    h1 = ln(x + o, p["ln1w"], p["ln1b"])
    ff = jnp.maximum(jnp.einsum("bse,fe->bsf", h1, p["w1"]) + p["b1"][0], 0.0)
    ff = jnp.einsum("bsf,ef->bse", ff, p["w2"]) + p["b2"][0]
    return ln(h1 + ff, p["ln2w"], p["ln2b"])


def _ref_encoder(x, layer_params, num_heads):
    for p in layer_params:
        x = _ref_layer(x, p, num_heads)
    return x


# ------------------------------- parameters --------------------------------- #
def init_layer_params(key, embed_dim, ff_dim):
    ks = jax.random.split(key, 8)
    scale = 0.02
    return {
        "wqkv": scale * jax.random.normal(ks[0], (3 * embed_dim, embed_dim), jnp.float32),
        "bqkv": scale * jax.random.normal(ks[1], (1, 3 * embed_dim), jnp.float32),
        "wo":   scale * jax.random.normal(ks[2], (embed_dim, embed_dim), jnp.float32),
        "bo":   scale * jax.random.normal(ks[3], (1, embed_dim), jnp.float32),
        "w1":   scale * jax.random.normal(ks[4], (ff_dim, embed_dim), jnp.float32),
        "b1":   scale * jax.random.normal(ks[5], (1, ff_dim), jnp.float32),
        "w2":   scale * jax.random.normal(ks[6], (embed_dim, ff_dim), jnp.float32),
        "b2":   scale * jax.random.normal(ks[7], (1, embed_dim), jnp.float32),
        "ln1w": jnp.ones((1, embed_dim), jnp.float32),
        "ln1b": jnp.zeros((1, embed_dim), jnp.float32),
        "ln2w": jnp.ones((1, embed_dim), jnp.float32),
        "ln2b": jnp.zeros((1, embed_dim), jnp.float32),
    }


# ---------------------------------- main ------------------------------------ #
if __name__ == "__main__":
    # small shapes consistent with the module: batch=2, seq=8, embed=32, heads=4
    B, S, E, H, F, NUM_LAYERS = 2, 8, 32, 4, 64, 2

    root = jax.random.PRNGKey(0)
    kx, *layer_keys = jax.random.split(root, NUM_LAYERS + 1)
    x = jax.random.normal(kx, (B, S, E), jnp.float32)
    layer_params = [init_layer_params(k, E, F) for k in layer_keys]

    fwd = jax.jit(functools.partial(temporal_transformer_encoder, num_heads=H))
    out = jax.block_until_ready(fwd(x, layer_params))

    ref = jax.block_until_ready(_ref_encoder(x, layer_params, H))
    assert out.shape == (B, S, E)
    # bf16 MXU matmuls (f32 accumulation) + approx softmax reciprocal vs pure-f32 reference.
    assert jnp.allclose(out, ref, atol=1e-2, rtol=1e-2), "mismatch vs JAX reference"

    print("KERNEL_OK")
</pallas_src>

<mosaic_0001>
module attributes {stable_mosaic.version = 11 : i64} {
  func.func @_encoder_layer_kernel(%arg0: i32, %arg1: i32, %arg2: memref<1x8x32xf32, #tpu.memory_space<vmem>>, %arg3: memref<1x32x96xbf16, #tpu.memory_space<vmem>>, %arg4: memref<1x1x96xf32, #tpu.memory_space<vmem>>, %arg5: memref<1x32x32xbf16, #tpu.memory_space<vmem>>, %arg6: memref<1x1x32xf32, #tpu.memory_space<vmem>>, %arg7: memref<1x32x64xbf16, #tpu.memory_space<vmem>>, %arg8: memref<1x1x64xf32, #tpu.memory_space<vmem>>, %arg9: memref<1x64x32xbf16, #tpu.memory_space<vmem>>, %arg10: memref<1x1x32xf32, #tpu.memory_space<vmem>>, %arg11: memref<1x1x32xf32, #tpu.memory_space<vmem>>, %arg12: memref<1x1x32xf32, #tpu.memory_space<vmem>>, %arg13: memref<1x1x32xf32, #tpu.memory_space<vmem>>, %arg14: memref<1x1x32xf32, #tpu.memory_space<vmem>>, %arg15: memref<1x8x32xf32, #tpu.memory_space<vmem>>) attributes {dimension_semantics = [#tpu.dimension_semantics<parallel>, #tpu.dimension_semantics<arbitrary>], iteration_bounds = array<i64: 2, 2>, scalar_prefetch = 0 : i64, scratch_operands = 0 : i64, tpu.core_type = #tpu.core_type<tc>, window_params = [{transform_indices = @transform_0, window_bounds = array<i64: 1, 8, 32>}, {transform_indices = @transform_1, window_bounds = array<i64: 1, 32, 96>}, {transform_indices = @transform_2, window_bounds = array<i64: 1, 1, 96>}, {transform_indices = @transform_3, window_bounds = array<i64: 1, 32, 32>}, {transform_indices = @transform_4, window_bounds = array<i64: 1, 1, 32>}, {transform_indices = @transform_5, window_bounds = array<i64: 1, 32, 64>}, {transform_indices = @transform_6, window_bounds = array<i64: 1, 1, 64>}, {transform_indices = @transform_7, window_bounds = array<i64: 1, 64, 32>}, {transform_indices = @transform_8, window_bounds = array<i64: 1, 1, 32>}, {transform_indices = @transform_9, window_bounds = array<i64: 1, 1, 32>}, {transform_indices = @transform_10, window_bounds = array<i64: 1, 1, 32>}, {transform_indices = @transform_11, window_bounds = array<i64: 1, 1, 32>}, {transform_indices = @transform_12, window_bounds = array<i64: 1, 1, 32>}, {transform_indices = @transform_13, window_bounds = array<i64: 1, 8, 32>}]} {
    %c0_i32 = arith.constant 0 : i32
    %0 = arith.cmpi eq, %arg1, %c0_i32 : i32
    %1 = arith.extui %0 : i1 to i32
    %c0_i32_0 = arith.constant 0 : i32
    %2 = arith.cmpi ne, %1, %c0_i32_0 : i32
    scf.if %2 {
      %c0_76 = arith.constant 0 : index
      %c0_77 = arith.constant 0 : index
      %c0_78 = arith.constant 0 : index
      %181 = vector.load %arg2[%c0_76, %c0_77, %c0_78] : memref<1x8x32xf32, #tpu.memory_space<vmem>>, vector<1x8x32xf32>
      %c0_79 = arith.constant 0 : index
      %c0_80 = arith.constant 0 : index
      %c0_81 = arith.constant 0 : index
      %182 = vector.load %arg15[%c0_79, %c0_80, %c0_81] : memref<1x8x32xf32, #tpu.memory_space<vmem>>, vector<1x8x32xf32>
      tpu.vector_store %arg15[%c0_79, %c0_80, %c0_81], %181 {strides = array<i32>} : memref<1x8x32xf32, #tpu.memory_space<vmem>>, vector<1x8x32xf32>,
    } else {
    }
    %c0 = arith.constant 0 : index
    %c0_1 = arith.constant 0 : index
    %c0_2 = arith.constant 0 : index
    %3 = vector.load %arg15[%c0, %c0_1, %c0_2] : memref<1x8x32xf32, #tpu.memory_space<vmem>>, vector<1x8x32xf32>
    %4 = vector.shape_cast %3 : vector<1x8x32xf32> to vector<8x32xf32>
    %5 = arith.truncf %4 : vector<8x32xf32> to vector<8x32xbf16>
    %c0_3 = arith.constant 0 : index
    %c0_4 = arith.constant 0 : index
    %c0_5 = arith.constant 0 : index
    %6 = vector.load %arg3[%c0_3, %c0_4, %c0_5] : memref<1x32x96xbf16, #tpu.memory_space<vmem>>, vector<1x32x96xbf16>
    %7 = vector.shape_cast %6 : vector<1x32x96xbf16> to vector<32x96xbf16>
    %cst = arith.constant dense<0.000000e+00> : vector<8x96xf32>
    %8 = tpu.matmul %5, %7, %cst {dimension_numbers = #tpu.dot_dimension_numbers<[1], [0], [0], [1], [0, 0, 1, 1], [], []>} : vector<8x32xbf16>, vector<32x96xbf16>, vector<8x96xf32> -> vector<8x96xf32>
    %c0_6 = arith.constant 0 : index
    %c0_7 = arith.constant 0 : index
    %c0_8 = arith.constant 0 : index
    %9 = vector.load %arg4[%c0_6, %c0_7, %c0_8] : memref<1x1x96xf32, #tpu.memory_space<vmem>>, vector<1x1x96xf32>
    %10 = vector.shape_cast %9 : vector<1x1x96xf32> to vector<1x96xf32>
    %11 = vector.broadcast %10 : vector<1x96xf32> to vector<8x96xf32>
    %12 = arith.addf %8, %11 : vector<8x96xf32>
    %13 = vector.extract_strided_slice %12 {offsets = [0, 0], sizes = [8, 8], strides = [1, 1]} : vector<8x96xf32> to vector<8x8xf32>
    %cst_9 = arith.constant 0.353553385 : f32
    %14 = vector.broadcast %cst_9 : f32 to vector<8x8xf32>
    %15 = arith.mulf %13, %14 : vector<8x8xf32>
    %16 = arith.truncf %15 : vector<8x8xf32> to vector<8x8xbf16>
    %17 = vector.extract_strided_slice %12 {offsets = [0, 32], sizes = [8, 8], strides = [1, 1]} : vector<8x96xf32> to vector<8x8xf32>
    %18 = arith.truncf %17 : vector<8x8xf32> to vector<8x8xbf16>
    %19 = vector.extract_strided_slice %12 {offsets = [0, 64], sizes = [8, 8], strides = [1, 1]} : vector<8x96xf32> to vector<8x8xf32>
    %20 = arith.truncf %19 : vector<8x8xf32> to vector<8x8xbf16>
    %21 = tpu.transpose %18, [1, 0] : vector<8x8xbf16> -> vector<8x8xbf16>
    %cst_10 = arith.constant dense<0.000000e+00> : vector<8x8xf32>
    %22 = tpu.matmul %16, %21, %cst_10 {dimension_numbers = #tpu.dot_dimension_numbers<[1], [0], [0], [1], [0, 0, 1, 1], [], []>} : vector<8x8xbf16>, vector<8x8xbf16>, vector<8x8xf32> -> vector<8x8xf32>
    %cst_11 = arith.constant dense<0xFF800000> : vector<8xf32>
    %23 = vector.multi_reduction <maximumf>, %22, %cst_11 [1] : vector<8x8xf32> to vector<8xf32>
    %24 = vector.shape_cast %23 : vector<8xf32> to vector<8x1xf32>
    %25 = vector.broadcast %24 : vector<8x1xf32> to vector<8x8xf32>
    %26 = arith.subf %22, %25 : vector<8x8xf32>
    %27 = math.exp %26 : vector<8x8xf32>
    %cst_12 = arith.constant dense<0.000000e+00> : vector<8xf32>
    %28 = vector.multi_reduction <add>, %27, %cst_12 [1] : vector<8x8xf32> to vector<8xf32>
    %29 = vector.shape_cast %28 : vector<8xf32> to vector<8x1xf32>
    %30 = tpu.reciprocal %29 {approx = true} : vector<8x1xf32> -> vector<8x1xf32>
    %31 = vector.broadcast %30 : vector<8x1xf32> to vector<8x8xf32>
    %32 = arith.mulf %27, %31 : vector<8x8xf32>
    %33 = arith.truncf %32 : vector<8x8xf32> to vector<8x8xbf16>
    %cst_13 = arith.constant dense<0.000000e+00> : vector<8x8xf32>
    %34 = tpu.matmul %33, %20, %cst_13 {dimension_numbers = #tpu.dot_dimension_numbers<[1], [0], [0], [1], [0, 0, 1, 1], [], []>} : vector<8x8xbf16>, vector<8x8xbf16>, vector<8x8xf32> -> vector<8x8xf32>
    %35 = vector.extract_strided_slice %12 {offsets = [0, 8], sizes = [8, 8], strides = [1, 1]} : vector<8x96xf32> to vector<8x8xf32>
    %cst_14 = arith.constant 0.353553385 : f32
    %36 = vector.broadcast %cst_14 : f32 to vector<8x8xf32>
    %37 = arith.mulf %35, %36 : vector<8x8xf32>
    %38 = arith.truncf %37 : vector<8x8xf32> to vector<8x8xbf16>
    %39 = vector.extract_strided_slice %12 {offsets = [0, 40], sizes = [8, 8], strides = [1, 1]} : vector<8x96xf32> to vector<8x8xf32>
    %40 = arith.truncf %39 : vector<8x8xf32> to vector<8x8xbf16>
    %41 = vector.extract_strided_slice %12 {offsets = [0, 72], sizes = [8, 8], strides = [1, 1]} : vector<8x96xf32> to vector<8x8xf32>
    %42 = arith.truncf %41 : vector<8x8xf32> to vector<8x8xbf16>
    %43 = tpu.transpose %40, [1, 0] : vector<8x8xbf16> -> vector<8x8xbf16>
    %cst_15 = arith.constant dense<0.000000e+00> : vector<8x8xf32>
    %44 = tpu.matmul %38, %43, %cst_15 {dimension_numbers = #tpu.dot_dimension_numbers<[1], [0], [0], [1], [0, 0, 1, 1], [], []>} : vector<8x8xbf16>, vector<8x8xbf16>, vector<8x8xf32> -> vector<8x8xf32>
    %cst_16 = arith.constant dense<0xFF800000> : vector<8xf32>
    %45 = vector.multi_reduction <maximumf>, %44, %cst_16 [1] : vector<8x8xf32> to vector<8xf32>
    %46 = vector.shape_cast %45 : vector<8xf32> to vector<8x1xf32>
    %47 = vector.broadcast %46 : vector<8x1xf32> to vector<8x8xf32>
    %48 = arith.subf %44, %47 : vector<8x8xf32>
    %49 = math.exp %48 : vector<8x8xf32>
    %cst_17 = arith.constant dense<0.000000e+00> : vector<8xf32>
    %50 = vector.multi_reduction <add>, %49, %cst_17 [1] : vector<8x8xf32> to vector<8xf32>
    %51 = vector.shape_cast %50 : vector<8xf32> to vector<8x1xf32>
    %52 = tpu.reciprocal %51 {approx = true} : vector<8x1xf32> -> vector<8x1xf32>
    %53 = vector.broadcast %52 : vector<8x1xf32> to vector<8x8xf32>
    %54 = arith.mulf %49, %53 : vector<8x8xf32>
    %55 = arith.truncf %54 : vector<8x8xf32> to vector<8x8xbf16>
    %cst_18 = arith.constant dense<0.000000e+00> : vector<8x8xf32>
    %56 = tpu.matmul %55, %42, %cst_18 {dimension_numbers = #tpu.dot_dimension_numbers<[1], [0], [0], [1], [0, 0, 1, 1], [], []>} : vector<8x8xbf16>, vector<8x8xbf16>, vector<8x8xf32> -> vector<8x8xf32>
    %57 = vector.extract_strided_slice %12 {offsets = [0, 16], sizes = [8, 8], strides = [1, 1]} : vector<8x96xf32> to vector<8x8xf32>
    %cst_19 = arith.constant 0.353553385 : f32
    %58 = vector.broadcast %cst_19 : f32 to vector<8x8xf32>
    %59 = arith.mulf %57, %58 : vector<8x8xf32>
    %60 = arith.truncf %59 : vector<8x8xf32> to vector<8x8xbf16>
    %61 = vector.extract_strided_slice %12 {offsets = [0, 48], sizes = [8, 8], strides = [1, 1]} : vector<8x96xf32> to vector<8x8xf32>
    %62 = arith.truncf %61 : vector<8x8xf32> to vector<8x8xbf16>
    %63 = vector.extract_strided_slice %12 {offsets = [0, 80], sizes = [8, 8], strides = [1, 1]} : vector<8x96xf32> to vector<8x8xf32>
    %64 = arith.truncf %63 : vector<8x8xf32> to vector<8x8xbf16>
    %65 = tpu.transpose %62, [1, 0] : vector<8x8xbf16> -> vector<8x8xbf16>
    %cst_20 = arith.constant dense<0.000000e+00> : vector<8x8xf32>
    %66 = tpu.matmul %60, %65, %cst_20 {dimension_numbers = #tpu.dot_dimension_numbers<[1], [0], [0], [1], [0, 0, 1, 1], [], []>} : vector<8x8xbf16>, vector<8x8xbf16>, vector<8x8xf32> -> vector<8x8xf32>
    %cst_21 = arith.constant dense<0xFF800000> : vector<8xf32>
    %67 = vector.multi_reduction <maximumf>, %66, %cst_21 [1] : vector<8x8xf32> to vector<8xf32>
    %68 = vector.shape_cast %67 : vector<8xf32> to vector<8x1xf32>
    %69 = vector.broadcast %68 : vector<8x1xf32> to vector<8x8xf32>
    %70 = arith.subf %66, %69 : vector<8x8xf32>
    %71 = math.exp %70 : vector<8x8xf32>
    %cst_22 = arith.constant dense<0.000000e+00> : vector<8xf32>
    %72 = vector.multi_reduction <add>, %71, %cst_22 [1] : vector<8x8xf32> to vector<8xf32>
    %73 = vector.shape_cast %72 : vector<8xf32> to vector<8x1xf32>
    %74 = tpu.reciprocal %73 {approx = true} : vector<8x1xf32> -> vector<8x1xf32>
    %75 = vector.broadcast %74 : vector<8x1xf32> to vector<8x8xf32>
    %76 = arith.mulf %71, %75 : vector<8x8xf32>
    %77 = arith.truncf %76 : vector<8x8xf32> to vector<8x8xbf16>
    %cst_23 = arith.constant dense<0.000000e+00> : vector<8x8xf32>
    %78 = tpu.matmul %77, %64, %cst_23 {dimension_numbers = #tpu.dot_dimension_numbers<[1], [0], [0], [1], [0, 0, 1, 1], [], []>} : vector<8x8xbf16>, vector<8x8xbf16>, vector<8x8xf32> -> vector<8x8xf32>
    %79 = vector.extract_strided_slice %12 {offsets = [0, 24], sizes = [8, 8], strides = [1, 1]} : vector<8x96xf32> to vector<8x8xf32>
    %cst_24 = arith.constant 0.353553385 : f32
    %80 = vector.broadcast %cst_24 : f32 to vector<8x8xf32>
    %81 = arith.mulf %79, %80 : vector<8x8xf32>
    %82 = arith.truncf %81 : vector<8x8xf32> to vector<8x8xbf16>
    %83 = vector.extract_strided_slice %12 {offsets = [0, 56], sizes = [8, 8], strides = [1, 1]} : vector<8x96xf32> to vector<8x8xf32>
    %84 = arith.truncf %83 : vector<8x8xf32> to vector<8x8xbf16>
    %85 = vector.extract_strided_slice %12 {offsets = [0, 88], sizes = [8, 8], strides = [1, 1]} : vector<8x96xf32> to vector<8x8xf32>
    %86 = arith.truncf %85 : vector<8x8xf32> to vector<8x8xbf16>
    %87 = tpu.transpose %84, [1, 0] : vector<8x8xbf16> -> vector<8x8xbf16>
    %cst_25 = arith.constant dense<0.000000e+00> : vector<8x8xf32>
    %88 = tpu.matmul %82, %87, %cst_25 {dimension_numbers = #tpu.dot_dimension_numbers<[1], [0], [0], [1], [0, 0, 1, 1], [], []>} : vector<8x8xbf16>, vector<8x8xbf16>, vector<8x8xf32> -> vector<8x8xf32>
    %cst_26 = arith.constant dense<0xFF800000> : vector<8xf32>
    %89 = vector.multi_reduction <maximumf>, %88, %cst_26 [1] : vector<8x8xf32> to vector<8xf32>
    %90 = vector.shape_cast %89 : vector<8xf32> to vector<8x1xf32>
    %91 = vector.broadcast %90 : vector<8x1xf32> to vector<8x8xf32>
    %92 = arith.subf %88, %91 : vector<8x8xf32>
    %93 = math.exp %92 : vector<8x8xf32>
    %cst_27 = arith.constant dense<0.000000e+00> : vector<8xf32>
    %94 = vector.multi_reduction <add>, %93, %cst_27 [1] : vector<8x8xf32> to vector<8xf32>
    %95 = vector.shape_cast %94 : vector<8xf32> to vector<8x1xf32>
    %96 = tpu.reciprocal %95 {approx = true} : vector<8x1xf32> -> vector<8x1xf32>
    %97 = vector.broadcast %96 : vector<8x1xf32> to vector<8x8xf32>
    %98 = arith.mulf %93, %97 : vector<8x8xf32>
    %99 = arith.truncf %98 : vector<8x8xf32> to vector<8x8xbf16>
    %cst_28 = arith.constant dense<0.000000e+00> : vector<8x8xf32>
    %100 = tpu.matmul %99, %86, %cst_28 {dimension_numbers = #tpu.dot_dimension_numbers<[1], [0], [0], [1], [0, 0, 1, 1], [], []>} : vector<8x8xbf16>, vector<8x8xbf16>, vector<8x8xf32> -> vector<8x8xf32>
    %101 = tpu.concatenate %34, %56, %78, %100 in 1 : vector<8x8xf32>, vector<8x8xf32>, vector<8x8xf32>, vector<8x8xf32> -> vector<8x32xf32>
    %102 = arith.truncf %101 : vector<8x32xf32> to vector<8x32xbf16>
    %c0_29 = arith.constant 0 : index
    %c0_30 = arith.constant 0 : index
    %c0_31 = arith.constant 0 : index
    %103 = vector.load %arg5[%c0_29, %c0_30, %c0_31] : memref<1x32x32xbf16, #tpu.memory_space<vmem>>, vector<1x32x32xbf16>
    %104 = vector.shape_cast %103 : vector<1x32x32xbf16> to vector<32x32xbf16>
    %cst_32 = arith.constant dense<0.000000e+00> : vector<8x32xf32>
    %105 = tpu.matmul %102, %104, %cst_32 {dimension_numbers = #tpu.dot_dimension_numbers<[1], [0], [0], [1], [0, 0, 1, 1], [], []>} : vector<8x32xbf16>, vector<32x32xbf16>, vector<8x32xf32> -> vector<8x32xf32>
    %c0_33 = arith.constant 0 : index
    %c0_34 = arith.constant 0 : index
    %c0_35 = arith.constant 0 : index
    %106 = vector.load %arg6[%c0_33, %c0_34, %c0_35] : memref<1x1x32xf32, #tpu.memory_space<vmem>>, vector<1x1x32xf32>
    %107 = vector.shape_cast %106 : vector<1x1x32xf32> to vector<1x32xf32>
    %108 = vector.broadcast %107 : vector<1x32xf32> to vector<8x32xf32>
    %109 = arith.addf %105, %108 : vector<8x32xf32>
    %110 = arith.addf %4, %109 : vector<8x32xf32>
    %c0_36 = arith.constant 0 : index
    %c0_37 = arith.constant 0 : index
    %c0_38 = arith.constant 0 : index
    %111 = vector.load %arg11[%c0_36, %c0_37, %c0_38] : memref<1x1x32xf32, #tpu.memory_space<vmem>>, vector<1x1x32xf32>
    %112 = vector.shape_cast %111 : vector<1x1x32xf32> to vector<1x32xf32>
    %c0_39 = arith.constant 0 : index
    %c0_40 = arith.constant 0 : index
    %c0_41 = arith.constant 0 : index
    %113 = vector.load %arg12[%c0_39, %c0_40, %c0_41] : memref<1x1x32xf32, #tpu.memory_space<vmem>>, vector<1x1x32xf32>
    %114 = vector.shape_cast %113 : vector<1x1x32xf32> to vector<1x32xf32>
    %cst_42 = arith.constant dense<0.000000e+00> : vector<8xf32>
    %115 = vector.multi_reduction <add>, %110, %cst_42 [1] : vector<8x32xf32> to vector<8xf32>
    %116 = vector.shape_cast %115 : vector<8xf32> to vector<8x1xf32>
    %cst_43 = arith.constant 3.200000e+01 : f32
    %117 = vector.broadcast %cst_43 : f32 to vector<8x1xf32>
    %118 = arith.divf %116, %117 : vector<8x1xf32>
    %119 = vector.broadcast %118 : vector<8x1xf32> to vector<8x32xf32>
    %120 = arith.subf %110, %119 : vector<8x32xf32>
    %121 = arith.mulf %120, %120 : vector<8x32xf32>
    %cst_44 = arith.constant dense<0.000000e+00> : vector<8xf32>
    %122 = vector.multi_reduction <add>, %121, %cst_44 [1] : vector<8x32xf32> to vector<8xf32>
    %123 = vector.shape_cast %122 : vector<8xf32> to vector<8x1xf32>
    %cst_45 = arith.constant 3.200000e+01 : f32
    %124 = vector.broadcast %cst_45 : f32 to vector<8x1xf32>
    %125 = arith.divf %123, %124 : vector<8x1xf32>
    %cst_46 = arith.constant 9.99999974E-6 : f32
    %126 = vector.broadcast %cst_46 : f32 to vector<8x1xf32>
    %127 = arith.addf %125, %126 : vector<8x1xf32>
    %128 = math.rsqrt %127 : vector<8x1xf32>
    %129 = vector.broadcast %128 : vector<8x1xf32> to vector<8x32xf32>
    %130 = arith.mulf %120, %129 : vector<8x32xf32>
    %131 = vector.broadcast %112 : vector<1x32xf32> to vector<8x32xf32>
    %132 = arith.mulf %130, %131 : vector<8x32xf32>
    %133 = vector.broadcast %114 : vector<1x32xf32> to vector<8x32xf32>
    %134 = arith.addf %132, %133 : vector<8x32xf32>
    %135 = arith.truncf %134 : vector<8x32xf32> to vector<8x32xbf16>
    %c0_47 = arith.constant 0 : index
    %c0_48 = arith.constant 0 : index
    %c0_49 = arith.constant 0 : index
    %136 = vector.load %arg7[%c0_47, %c0_48, %c0_49] : memref<1x32x64xbf16, #tpu.memory_space<vmem>>, vector<1x32x64xbf16>
    %137 = vector.shape_cast %136 : vector<1x32x64xbf16> to vector<32x64xbf16>
    %cst_50 = arith.constant dense<0.000000e+00> : vector<8x64xf32>
    %138 = tpu.matmul %135, %137, %cst_50 {dimension_numbers = #tpu.dot_dimension_numbers<[1], [0], [0], [1], [0, 0, 1, 1], [], []>} : vector<8x32xbf16>, vector<32x64xbf16>, vector<8x64xf32> -> vector<8x64xf32>
    %c0_51 = arith.constant 0 : index
    %c0_52 = arith.constant 0 : index
    %c0_53 = arith.constant 0 : index
    %139 = vector.load %arg8[%c0_51, %c0_52, %c0_53] : memref<1x1x64xf32, #tpu.memory_space<vmem>>, vector<1x1x64xf32>
    %140 = vector.shape_cast %139 : vector<1x1x64xf32> to vector<1x64xf32>
    %141 = vector.broadcast %140 : vector<1x64xf32> to vector<8x64xf32>
    %142 = arith.addf %138, %141 : vector<8x64xf32>
    %cst_54 = arith.constant 0.000000e+00 : f32
    %143 = vector.broadcast %cst_54 : f32 to vector<8x64xf32>
    %144 = arith.maximumf %142, %143 : vector<8x64xf32>
    %145 = arith.truncf %144 : vector<8x64xf32> to vector<8x64xbf16>
    %c0_55 = arith.constant 0 : index
    %c0_56 = arith.constant 0 : index
    %c0_57 = arith.constant 0 : index
    %146 = vector.load %arg9[%c0_55, %c0_56, %c0_57] : memref<1x64x32xbf16, #tpu.memory_space<vmem>>, vector<1x64x32xbf16>
    %147 = vector.shape_cast %146 : vector<1x64x32xbf16> to vector<64x32xbf16>
    %cst_58 = arith.constant dense<0.000000e+00> : vector<8x32xf32>
    %148 = tpu.matmul %145, %147, %cst_58 {dimension_numbers = #tpu.dot_dimension_numbers<[1], [0], [0], [1], [0, 0, 1, 1], [], []>} : vector<8x64xbf16>, vector<64x32xbf16>, vector<8x32xf32> -> vector<8x32xf32>
    %c0_59 = arith.constant 0 : index
    %c0_60 = arith.constant 0 : index
    %c0_61 = arith.constant 0 : index
    %149 = vector.load %arg10[%c0_59, %c0_60, %c0_61] : memref<1x1x32xf32, #tpu.memory_space<vmem>>, vector<1x1x32xf32>
    %150 = vector.shape_cast %149 : vector<1x1x32xf32> to vector<1x32xf32>
    %151 = vector.broadcast %150 : vector<1x32xf32> to vector<8x32xf32>
    %152 = arith.addf %148, %151 : vector<8x32xf32>
    %153 = arith.addf %134, %152 : vector<8x32xf32>
    %c0_62 = arith.constant 0 : index
    %c0_63 = arith.constant 0 : index
    %c0_64 = arith.constant 0 : index
    %154 = vector.load %arg13[%c0_62, %c0_63, %c0_64] : memref<1x1x32xf32, #tpu.memory_space<vmem>>, vector<1x1x32xf32>
    %155 = vector.shape_cast %154 : vector<1x1x32xf32> to vector<1x32xf32>
    %c0_65 = arith.constant 0 : index
    %c0_66 = arith.constant 0 : index
    %c0_67 = arith.constant 0 : index
    %156 = vector.load %arg14[%c0_65, %c0_66, %c0_67] : memref<1x1x32xf32, #tpu.memory_space<vmem>>, vector<1x1x32xf32>
    %157 = vector.shape_cast %156 : vector<1x1x32xf32> to vector<1x32xf32>
    %cst_68 = arith.constant dense<0.000000e+00> : vector<8xf32>
    %158 = vector.multi_reduction <add>, %153, %cst_68 [1] : vector<8x32xf32> to vector<8xf32>
    %159 = vector.shape_cast %158 : vector<8xf32> to vector<8x1xf32>
    %cst_69 = arith.constant 3.200000e+01 : f32
    %160 = vector.broadcast %cst_69 : f32 to vector<8x1xf32>
    %161 = arith.divf %159, %160 : vector<8x1xf32>
    %162 = vector.broadcast %161 : vector<8x1xf32> to vector<8x32xf32>
    %163 = arith.subf %153, %162 : vector<8x32xf32>
    %164 = arith.mulf %163, %163 : vector<8x32xf32>
    %cst_70 = arith.constant dense<0.000000e+00> : vector<8xf32>
    %165 = vector.multi_reduction <add>, %164, %cst_70 [1] : vector<8x32xf32> to vector<8xf32>
    %166 = vector.shape_cast %165 : vector<8xf32> to vector<8x1xf32>
    %cst_71 = arith.constant 3.200000e+01 : f32
    %167 = vector.broadcast %cst_71 : f32 to vector<8x1xf32>
    %168 = arith.divf %166, %167 : vector<8x1xf32>
    %cst_72 = arith.constant 9.99999974E-6 : f32
    %169 = vector.broadcast %cst_72 : f32 to vector<8x1xf32>
    %170 = arith.addf %168, %169 : vector<8x1xf32>
    %171 = math.rsqrt %170 : vector<8x1xf32>
    %172 = vector.broadcast %171 : vector<8x1xf32> to vector<8x32xf32>
    %173 = arith.mulf %163, %172 : vector<8x32xf32>
    %174 = vector.broadcast %155 : vector<1x32xf32> to vector<8x32xf32>
    %175 = arith.mulf %173, %174 : vector<8x32xf32>
    %176 = vector.broadcast %157 : vector<1x32xf32> to vector<8x32xf32>
    %177 = arith.addf %175, %176 : vector<8x32xf32>
    %c0_73 = arith.constant 0 : index
    %c0_74 = arith.constant 0 : index
    %c0_75 = arith.constant 0 : index
    %178 = vector.load %arg15[%c0_73, %c0_74, %c0_75] : memref<1x8x32xf32, #tpu.memory_space<vmem>>, vector<1x8x32xf32>
    %179 = vector.shape_cast %178 : vector<1x8x32xf32> to vector<8x32xf32>
    %180 = vector.shape_cast %177 : vector<8x32xf32> to vector<1x8x32xf32>
    tpu.vector_store %arg15[%c0_73, %c0_74, %c0_75], %180 {strides = array<i32>} : memref<1x8x32xf32, #tpu.memory_space<vmem>>, vector<1x8x32xf32>,
    return
  }
  func.func @transform_0(%arg0: i32, %arg1: i32) -> (i32, i32, i32) {
    %c0_i32 = arith.constant 0 : i32
    %c0_i32_0 = arith.constant 0 : i32
    %c0_i32_1 = arith.constant 0 : i32
    return %arg0, %c0_i32, %c0_i32_0 : i32, i32, i32
  }
  func.func @transform_1(%arg0: i32, %arg1: i32) -> (i32, i32, i32) {
    %c0_i32 = arith.constant 0 : i32
    %c0_i32_0 = arith.constant 0 : i32
    %c0_i32_1 = arith.constant 0 : i32
    return %arg1, %c0_i32, %c0_i32_0 : i32, i32, i32
  }
  func.func @transform_2(%arg0: i32, %arg1: i32) -> (i32, i32, i32) {
    %c0_i32 = arith.constant 0 : i32
    %c0_i32_0 = arith.constant 0 : i32
    %c0_i32_1 = arith.constant 0 : i32
    return %arg1, %c0_i32, %c0_i32_0 : i32, i32, i32
  }
  func.func @transform_3(%arg0: i32, %arg1: i32) -> (i32, i32, i32) {
    %c0_i32 = arith.constant 0 : i32
    %c0_i32_0 = arith.constant 0 : i32
    %c0_i32_1 = arith.constant 0 : i32
    return %arg1, %c0_i32, %c0_i32_0 : i32, i32, i32
  }
  func.func @transform_4(%arg0: i32, %arg1: i32) -> (i32, i32, i32) {
    %c0_i32 = arith.constant 0 : i32
    %c0_i32_0 = arith.constant 0 : i32
    %c0_i32_1 = arith.constant 0 : i32
    return %arg1, %c0_i32, %c0_i32_0 : i32, i32, i32
  }
  func.func @transform_5(%arg0: i32, %arg1: i32) -> (i32, i32, i32) {
    %c0_i32 = arith.constant 0 : i32
    %c0_i32_0 = arith.constant 0 : i32
    %c0_i32_1 = arith.constant 0 : i32
    return %arg1, %c0_i32, %c0_i32_0 : i32, i32, i32
  }
  func.func @transform_6(%arg0: i32, %arg1: i32) -> (i32, i32, i32) {
    %c0_i32 = arith.constant 0 : i32
    %c0_i32_0 = arith.constant 0 : i32
    %c0_i32_1 = arith.constant 0 : i32
    return %arg1, %c0_i32, %c0_i32_0 : i32, i32, i32
  }
  func.func @transform_7(%arg0: i32, %arg1: i32) -> (i32, i32, i32) {
    %c0_i32 = arith.constant 0 : i32
    %c0_i32_0 = arith.constant 0 : i32
    %c0_i32_1 = arith.constant 0 : i32
    return %arg1, %c0_i32, %c0_i32_0 : i32, i32, i32
  }
  func.func @transform_8(%arg0: i32, %arg1: i32) -> (i32, i32, i32) {
    %c0_i32 = arith.constant 0 : i32
    %c0_i32_0 = arith.constant 0 : i32
    %c0_i32_1 = arith.constant 0 : i32
    return %arg1, %c0_i32, %c0_i32_0 : i32, i32, i32
  }
  func.func @transform_9(%arg0: i32, %arg1: i32) -> (i32, i32, i32) {
    %c0_i32 = arith.constant 0 : i32
    %c0_i32_0 = arith.constant 0 : i32
    %c0_i32_1 = arith.constant 0 : i32
    return %arg1, %c0_i32, %c0_i32_0 : i32, i32, i32
  }
  func.func @transform_10(%arg0: i32, %arg1: i32) -> (i32, i32, i32) {
    %c0_i32 = arith.constant 0 : i32
    %c0_i32_0 = arith.constant 0 : i32
    %c0_i32_1 = arith.constant 0 : i32
    return %arg1, %c0_i32, %c0_i32_0 : i32, i32, i32
  }
  func.func @transform_11(%arg0: i32, %arg1: i32) -> (i32, i32, i32) {
    %c0_i32 = arith.constant 0 : i32
    %c0_i32_0 = arith.constant 0 : i32
    %c0_i32_1 = arith.constant 0 : i32
    return %arg1, %c0_i32, %c0_i32_0 : i32, i32, i32
  }
  func.func @transform_12(%arg0: i32, %arg1: i32) -> (i32, i32, i32) {
    %c0_i32 = arith.constant 0 : i32
    %c0_i32_0 = arith.constant 0 : i32
    %c0_i32_1 = arith.constant 0 : i32
    return %arg1, %c0_i32, %c0_i32_0 : i32, i32, i32
  }
  func.func @transform_13(%arg0: i32, %arg1: i32) -> (i32, i32, i32) {
    %c0_i32 = arith.constant 0 : i32
    %c0_i32_0 = arith.constant 0 : i32
    %c0_i32_1 = arith.constant 0 : i32
    return %arg0, %c0_i32, %c0_i32_0 : i32, i32, i32
  }
}

</mosaic_0001>

<llo_original>
// kernel: temporal_transformer_encoder.1
$region0: #{temporal_transformer_encoder.1}
  #allocation0 [shape = 'u32[]', space=smem, size = 0x4, offset = 0x4, fixed_abs, tag = 'smem constant byte address 0x4 - core index']
  #allocation1 [shape = 'u32[72,128]{1,0:T(1,128)}', space=vmem, size = 0x9000, scoped, tag = 'internal scratch']
  %s0 = inlined_call_operand.vmem [shape: f32[2,8,32], index: 0, kind: input, shape index: {}]
  %s1 = inlined_call_operand.vmem [shape: bf16[2,32,96], index: 1, kind: input, shape index: {}]
  %s2 = inlined_call_operand.vmem [shape: f32[2,1,96], index: 2, kind: input, shape index: {}]
  %s3 = inlined_call_operand.vmem [shape: bf16[2,32,32], index: 3, kind: input, shape index: {}]
  %s4 = inlined_call_operand.vmem [shape: f32[2,1,32], index: 4, kind: input, shape index: {}]
  %s5 = inlined_call_operand.vmem [shape: bf16[2,32,64], index: 5, kind: input, shape index: {}]
  %s6 = inlined_call_operand.vmem [shape: f32[2,1,64], index: 6, kind: input, shape index: {}]
  %s7 = inlined_call_operand.vmem [shape: bf16[2,64,32], index: 7, kind: input, shape index: {}]
  %s8 = inlined_call_operand.vmem [shape: f32[2,1,32], index: 8, kind: input, shape index: {}]
  %s9 = inlined_call_operand.vmem [shape: f32[2,1,32], index: 9, kind: input, shape index: {}]
  %s10 = inlined_call_operand.vmem [shape: f32[2,1,32], index: 10, kind: input, shape index: {}]
  %s11 = inlined_call_operand.vmem [shape: f32[2,1,32], index: 11, kind: input, shape index: {}]
  %s12 = inlined_call_operand.vmem [shape: f32[2,1,32], index: 12, kind: input, shape index: {}]
  %s13 = inlined_call_operand.hbm [shape: f32[2,8,32], index: 13, kind: output, shape index: {}]
  %s14 = sld [smem:[#allocation0]]
  $region89: #{temporal_transformer_encoder.1} parent=0
    _
  %s16 = ssub.s32 1, %s14
  %s17 = scalar_select 0, %s16, %s14
  $region1: #{temporal_transformer_encoder.1} parent=0
    #allocation2 [shape = 'u8[8192]{0}', space=vmem, size = 0x2000, scoped, tag = 'output window, operand 0']
    #allocation3 [shape = 's32[2]{0}', space=sflag, size = 0x8, scoped, tag = 'scoped memory for temporal_transformer_encoder.1']
    %18 = vsyncpa [#allocation3], 0
    %s19 = scalar_lea.sflag [#allocation3], 1
    %20 = vsyncpa %s19, 0
    loop: start=0, step=1, limit=6
    $region2: #{temporal_transformer_encoder.1} parent=1 // loop_pre_header
      _
    $region3: #{temporal_transformer_encoder.1} parent=1 // loop_header
      %s22 = sphi 0, %s26
      %p23 = scmp.ge.s32.totalorder %s22, 6
      %s29 = sphi 0, %s41
      %s30 = sphi 0, %s37
      %s31 = sphi 0, %s29
      %s32 = sphi 0, %s30
      %s33 = sphi 0, %s31
      %s34 = sphi 0, %s32
      %s44 = sphi 0, %s46
      %s47 = sphi 0, %s44
      %s48 = sphi 0, %s47
      %s64 = sphi 0, %s48
      %s70 = sphi 0, %s72
      %s73 = sphi 0, %s70
      %s74 = sphi 0, %s73
      %s90 = sphi 0, %s74
      %s96 = sphi 0, %s98
      %s99 = sphi 0, %s96
      %s100 = sphi 0, %s99
      %s116 = sphi 0, %s100
      %s122 = sphi 0, %s124
      %s125 = sphi 0, %s122
      %s126 = sphi 0, %s125
      %s142 = sphi 0, %s126
      %s148 = sphi 0, %s150
      %s151 = sphi 0, %s148
      %s152 = sphi 0, %s151
      %s168 = sphi 0, %s152
      %s174 = sphi 0, %s176
      %s177 = sphi 0, %s174
      %s178 = sphi 0, %s177
      %s194 = sphi 0, %s178
      %s200 = sphi 0, %s202
      %s203 = sphi 0, %s200
      %s204 = sphi 0, %s203
      %s220 = sphi 0, %s204
      %s226 = sphi 0, %s228
      %s229 = sphi 0, %s226
      %s230 = sphi 0, %s229
      %s246 = sphi 0, %s230
      %s252 = sphi 0, %s254
      %s255 = sphi 0, %s252
      %s256 = sphi 0, %s255
      %s272 = sphi 0, %s256
      %s278 = sphi 0, %s280
      %s281 = sphi 0, %s278
      %s282 = sphi 0, %s281
      %s298 = sphi 0, %s282
      %s304 = sphi 0, %s306
      %s307 = sphi 0, %s304
      %s308 = sphi 0, %s307
      %s324 = sphi 0, %s308
      %s330 = sphi 0, %s332
      %s333 = sphi 0, %s330
      %s334 = sphi 0, %s333
      %s350 = sphi 0, %s334
      %s356 = sphi 0, %s358
      %s359 = sphi 0, %s356
      %s360 = sphi 0, %s359
      %s376 = sphi 0, %s360
      %s382 = sphi 0, %s384
      %s385 = sphi 0, %s382
      %s386 = sphi 0, %s385
      %s402 = sphi 0, %s386
    $region4: #{temporal_transformer_encoder.1} parent=1 // loop_header_branch
      %25 = sbr.rel (%p23) target = $region8
    $region5: #{temporal_transformer_encoder.1} parent=1 // loop_body
      %s27 = ssub.s32 %s22, 1
      %s28 = ssub.s32 %s22, 2
      %s35 = sadd.s32 1, %s30
      %p36 = scmp.ge.s32.totalorder %s35, 2
      %s37 = scalar_select %p36, 0, %s35
      %s38 = sadd.s32 1, %s29
      %s39 = scalar_select %p36, %s38, %s29
      %p40 = scmp.ge.s32.totalorder %s39, 2
      %s41 = scalar_select %p40, 0, %s39
      %s42 = ssub.s32 %s29, %s41
      %p43 = scmp.eq.s32.totalorder %s42, 0
      %s45 = sadd.s32 %s44, 1
      %s46 = scalar_select %p43, %s44, %s45
      %p49 = pneg %p43
      %p50 = scmp.eq.s32.totalorder %s22, 3
      %p51 = por %p49, %p50
      %p52 = scmp.ne.s32.totalorder %s44, %s47
      %p53 = scmp.eq.s32.totalorder %s22, 0
      %p54 = por %p52, %p53
      %p55 = scmp.ne.s32.totalorder %s44, %s47
      %p56 = scmp.eq.s32.totalorder %s27, 3
      %p57 = por %p55, %p56
      %p58 = scmp.ne.s32.totalorder %s47, %s48
      %p59 = scmp.eq.s32.totalorder %s27, 0
      %p60 = por %p58, %p59
      %p61 = scmp.ne.s32.totalorder %s47, %s48
      %p62 = scmp.eq.s32.totalorder %s28, 3
      %p63 = por %p61, %p62
      %p65 = scmp.ne.s32.totalorder %s48, %s64
      %p66 = scmp.eq.s32.totalorder %s28, 0
      %p67 = por %p65, %p66
      %s68 = ssub.s32 %s30, %s37
      %p69 = scmp.eq.s32.totalorder %s68, 0
      %s71 = sadd.s32 %s70, 1
      %s72 = scalar_select %p69, %s70, %s71
      %p75 = pneg %p69
      %p76 = scmp.eq.s32.totalorder %s22, 3
      %p77 = por %p75, %p76
      %p78 = scmp.ne.s32.totalorder %s70, %s73
      %p79 = scmp.eq.s32.totalorder %s22, 0
      %p80 = por %p78, %p79
      %p81 = scmp.ne.s32.totalorder %s70, %s73
      %p82 = scmp.eq.s32.totalorder %s27, 3
      %p83 = por %p81, %p82
      %p84 = scmp.ne.s32.totalorder %s73, %s74
      %p85 = scmp.eq.s32.totalorder %s27, 0
      %p86 = por %p84, %p85
      %p87 = scmp.ne.s32.totalorder %s73, %s74
      %p88 = scmp.eq.s32.totalorder %s28, 3
      %p89 = por %p87, %p88
      %p91 = scmp.ne.s32.totalorder %s74, %s90
      %p92 = scmp.eq.s32.totalorder %s28, 0
      %p93 = por %p91, %p92
      %s94 = ssub.s32 %s30, %s37
      %p95 = scmp.eq.s32.totalorder %s94, 0
      %s97 = sadd.s32 %s96, 1
      %s98 = scalar_select %p95, %s96, %s97
      %p101 = pneg %p95
      %p102 = scmp.eq.s32.totalorder %s22, 3
      %p103 = por %p101, %p102
      %p104 = scmp.ne.s32.totalorder %s96, %s99
      %p105 = scmp.eq.s32.totalorder %s22, 0
      %p106 = por %p104, %p105
      %p107 = scmp.ne.s32.totalorder %s96, %s99
      %p108 = scmp.eq.s32.totalorder %s27, 3
      %p109 = por %p107, %p108
      %p110 = scmp.ne.s32.totalorder %s99, %s100
      %p111 = scmp.eq.s32.totalorder %s27, 0
      %p112 = por %p110, %p111
      %p113 = scmp.ne.s32.totalorder %s99, %s100
      %p114 = scmp.eq.s32.totalorder %s28, 3
      %p115 = por %p113, %p114
      %p117 = scmp.ne.s32.totalorder %s100, %s116
      %p118 = scmp.eq.s32.totalorder %s28, 0
      %p119 = por %p117, %p118
      %s120 = ssub.s32 %s30, %s37
      %p121 = scmp.eq.s32.totalorder %s120, 0
      %s123 = sadd.s32 %s122, 1
      %s124 = scalar_select %p121, %s122, %s123
      %p127 = pneg %p121
      %p128 = scmp.eq.s32.totalorder %s22, 3
      %p129 = por %p127, %p128
      %p130 = scmp.ne.s32.totalorder %s122, %s125
      %p131 = scmp.eq.s32.totalorder %s22, 0
      %p132 = por %p130, %p131
      %p133 = scmp.ne.s32.totalorder %s122, %s125
      %p134 = scmp.eq.s32.totalorder %s27, 3
      %p135 = por %p133, %p134
      %p136 = scmp.ne.s32.totalorder %s125, %s126
      %p137 = scmp.eq.s32.totalorder %s27, 0
      %p138 = por %p136, %p137
      %p139 = scmp.ne.s32.totalorder %s125, %s126
      %p140 = scmp.eq.s32.totalorder %s28, 3
      %p141 = por %p139, %p140
      %p143 = scmp.ne.s32.totalorder %s126, %s142
      %p144 = scmp.eq.s32.totalorder %s28, 0
      %p145 = por %p143, %p144
      %s146 = ssub.s32 %s30, %s37
      %p147 = scmp.eq.s32.totalorder %s146, 0
      %s149 = sadd.s32 %s148, 1
      %s150 = scalar_select %p147, %s148, %s149
      %p153 = pneg %p147
      %p154 = scmp.eq.s32.totalorder %s22, 3
      %p155 = por %p153, %p154
      %p156 = scmp.ne.s32.totalorder %s148, %s151
      %p157 = scmp.eq.s32.totalorder %s22, 0
      %p158 = por %p156, %p157
      %p159 = scmp.ne.s32.totalorder %s148, %s151
      %p160 = scmp.eq.s32.totalorder %s27, 3
      %p161 = por %p159, %p160
      %p162 = scmp.ne.s32.totalorder %s151, %s152
      %p163 = scmp.eq.s32.totalorder %s27, 0
      %p164 = por %p162, %p163
      %p165 = scmp.ne.s32.totalorder %s151, %s152
      %p166 = scmp.eq.s32.totalorder %s28, 3
      %p167 = por %p165, %p166
      %p169 = scmp.ne.s32.totalorder %s152, %s168
      %p170 = scmp.eq.s32.totalorder %s28, 0
      %p171 = por %p169, %p170
      %s172 = ssub.s32 %s30, %s37
      %p173 = scmp.eq.s32.totalorder %s172, 0
      %s175 = sadd.s32 %s174, 1
      %s176 = scalar_select %p173, %s174, %s175
      %p179 = pneg %p173
      %p180 = scmp.eq.s32.totalorder %s22, 3
      %p181 = por %p179, %p180
      %p182 = scmp.ne.s32.totalorder %s174, %s177
      %p183 = scmp.eq.s32.totalorder %s22, 0
      %p184 = por %p182, %p183
      %p185 = scmp.ne.s32.totalorder %s174, %s177
      %p186 = scmp.eq.s32.totalorder %s27, 3
      %p187 = por %p185, %p186
      %p188 = scmp.ne.s32.totalorder %s177, %s178
      %p189 = scmp.eq.s32.totalorder %s27, 0
      %p190 = por %p188, %p189
      %p191 = scmp.ne.s32.totalorder %s177, %s178
      %p192 = scmp.eq.s32.totalorder %s28, 3
      %p193 = por %p191, %p192
      %p195 = scmp.ne.s32.totalorder %s178, %s194
      %p196 = scmp.eq.s32.totalorder %s28, 0
      %p197 = por %p195, %p196
      %s198 = ssub.s32 %s30, %s37
      %p199 = scmp.eq.s32.totalorder %s198, 0
      %s201 = sadd.s32 %s200, 1
      %s202 = scalar_select %p199, %s200, %s201
      %p205 = pneg %p199
      %p206 = scmp.eq.s32.totalorder %s22, 3
      %p207 = por %p205, %p206
      %p208 = scmp.ne.s32.totalorder %s200, %s203
      %p209 = scmp.eq.s32.totalorder %s22, 0
      %p210 = por %p208, %p209
      %p211 = scmp.ne.s32.totalorder %s200, %s203
      %p212 = scmp.eq.s32.totalorder %s27, 3
      %p213 = por %p211, %p212
      %p214 = scmp.ne.s32.totalorder %s203, %s204
      %p215 = scmp.eq.s32.totalorder %s27, 0
      %p216 = por %p214, %p215
      %p217 = scmp.ne.s32.totalorder %s203, %s204
      %p218 = scmp.eq.s32.totalorder %s28, 3
      %p219 = por %p217, %p218
      %p221 = scmp.ne.s32.totalorder %s204, %s220
      %p222 = scmp.eq.s32.totalorder %s28, 0
      %p223 = por %p221, %p222
      %s224 = ssub.s32 %s30, %s37
      %p225 = scmp.eq.s32.totalorder %s224, 0
      %s227 = sadd.s32 %s226, 1
      %s228 = scalar_select %p225, %s226, %s227
      %p231 = pneg %p225
      %p232 = scmp.eq.s32.totalorder %s22, 3
      %p233 = por %p231, %p232
      %p234 = scmp.ne.s32.totalorder %s226, %s229
      %p235 = scmp.eq.s32.totalorder %s22, 0
      %p236 = por %p234, %p235
      %p237 = scmp.ne.s32.totalorder %s226, %s229
      %p238 = scmp.eq.s32.totalorder %s27, 3
      %p239 = por %p237, %p238
      %p240 = scmp.ne.s32.totalorder %s229, %s230
      %p241 = scmp.eq.s32.totalorder %s27, 0
      %p242 = por %p240, %p241
      %p243 = scmp.ne.s32.totalorder %s229, %s230
      %p244 = scmp.eq.s32.totalorder %s28, 3
      %p245 = por %p243, %p244
      %p247 = scmp.ne.s32.totalorder %s230, %s246
      %p248 = scmp.eq.s32.totalorder %s28, 0
      %p249 = por %p247, %p248
      %s250 = ssub.s32 %s30, %s37
      %p251 = scmp.eq.s32.totalorder %s250, 0
      %s253 = sadd.s32 %s252, 1
      %s254 = scalar_select %p251, %s252, %s253
      %p257 = pneg %p251
      %p258 = scmp.eq.s32.totalorder %s22, 3
      %p259 = por %p257, %p258
      %p260 = scmp.ne.s32.totalorder %s252, %s255
      %p261 = scmp.eq.s32.totalorder %s22, 0
      %p262 = por %p260, %p261
      %p263 = scmp.ne.s32.totalorder %s252, %s255
      %p264 = scmp.eq.s32.totalorder %s27, 3
      %p265 = por %p263, %p264
      %p266 = scmp.ne.s32.totalorder %s255, %s256
      %p267 = scmp.eq.s32.totalorder %s27, 0
      %p268 = por %p266, %p267
      %p269 = scmp.ne.s32.totalorder %s255, %s256
      %p270 = scmp.eq.s32.totalorder %s28, 3
      %p271 = por %p269, %p270
      %p273 = scmp.ne.s32.totalorder %s256, %s272
      %p274 = scmp.eq.s32.totalorder %s28, 0
      %p275 = por %p273, %p274
      %s276 = ssub.s32 %s30, %s37
      %p277 = scmp.eq.s32.totalorder %s276, 0
      %s279 = sadd.s32 %s278, 1
      %s280 = scalar_select %p277, %s278, %s279
      %p283 = pneg %p277
      %p284 = scmp.eq.s32.totalorder %s22, 3
      %p285 = por %p283, %p284
      %p286 = scmp.ne.s32.totalorder %s278, %s281
      %p287 = scmp.eq.s32.totalorder %s22, 0
      %p288 = por %p286, %p287
      %p289 = scmp.ne.s32.totalorder %s278, %s281
      %p290 = scmp.eq.s32.totalorder %s27, 3
      %p291 = por %p289, %p290
      %p292 = scmp.ne.s32.totalorder %s281, %s282
      %p293 = scmp.eq.s32.totalorder %s27, 0
      %p294 = por %p292, %p293
      %p295 = scmp.ne.s32.totalorder %s281, %s282
      %p296 = scmp.eq.s32.totalorder %s28, 3
      %p297 = por %p295, %p296
      %p299 = scmp.ne.s32.totalorder %s282, %s298
      %p300 = scmp.eq.s32.totalorder %s28, 0
      %p301 = por %p299, %p300
      %s302 = ssub.s32 %s30, %s37
      %p303 = scmp.eq.s32.totalorder %s302, 0
      %s305 = sadd.s32 %s304, 1
      %s306 = scalar_select %p303, %s304, %s305
      %p309 = pneg %p303
      %p310 = scmp.eq.s32.totalorder %s22, 3
      %p311 = por %p309, %p310
      %p312 = scmp.ne.s32.totalorder %s304, %s307
      %p313 = scmp.eq.s32.totalorder %s22, 0
      %p314 = por %p312, %p313
      %p315 = scmp.ne.s32.totalorder %s304, %s307
      %p316 = scmp.eq.s32.totalorder %s27, 3
      %p317 = por %p315, %p316
      %p318 = scmp.ne.s32.totalorder %s307, %s308
      %p319 = scmp.eq.s32.totalorder %s27, 0
      %p320 = por %p318, %p319
      %p321 = scmp.ne.s32.totalorder %s307, %s308
      %p322 = scmp.eq.s32.totalorder %s28, 3
      %p323 = por %p321, %p322
      %p325 = scmp.ne.s32.totalorder %s308, %s324
      %p326 = scmp.eq.s32.totalorder %s28, 0
      %p327 = por %p325, %p326
      %s328 = ssub.s32 %s30, %s37
      %p329 = scmp.eq.s32.totalorder %s328, 0
      %s331 = sadd.s32 %s330, 1
      %s332 = scalar_select %p329, %s330, %s331
      %p335 = pneg %p329
      %p336 = scmp.eq.s32.totalorder %s22, 3
      %p337 = por %p335, %p336
      %p338 = scmp.ne.s32.totalorder %s330, %s333
      %p339 = scmp.eq.s32.totalorder %s22, 0
      %p340 = por %p338, %p339
      %p341 = scmp.ne.s32.totalorder %s330, %s333
      %p342 = scmp.eq.s32.totalorder %s27, 3
      %p343 = por %p341, %p342
      %p344 = scmp.ne.s32.totalorder %s333, %s334
      %p345 = scmp.eq.s32.totalorder %s27, 0
      %p346 = por %p344, %p345
      %p347 = scmp.ne.s32.totalorder %s333, %s334
      %p348 = scmp.eq.s32.totalorder %s28, 3
      %p349 = por %p347, %p348
      %p351 = scmp.ne.s32.totalorder %s334, %s350
      %p352 = scmp.eq.s32.totalorder %s28, 0
      %p353 = por %p351, %p352
      %s354 = ssub.s32 %s30, %s37
      %p355 = scmp.eq.s32.totalorder %s354, 0
      %s357 = sadd.s32 %s356, 1
      %s358 = scalar_select %p355, %s356, %s357
      %p361 = pneg %p355
      %p362 = scmp.eq.s32.totalorder %s22, 3
      %p363 = por %p361, %p362
      %p364 = scmp.ne.s32.totalorder %s356, %s359
      %p365 = scmp.eq.s32.totalorder %s22, 0
      %p366 = por %p364, %p365
      %p367 = scmp.ne.s32.totalorder %s356, %s359
      %p368 = scmp.eq.s32.totalorder %s27, 3
      %p369 = por %p367, %p368
      %p370 = scmp.ne.s32.totalorder %s359, %s360
      %p371 = scmp.eq.s32.totalorder %s27, 0
      %p372 = por %p370, %p371
      %p373 = scmp.ne.s32.totalorder %s359, %s360
      %p374 = scmp.eq.s32.totalorder %s28, 3
      %p375 = por %p373, %p374
      %p377 = scmp.ne.s32.totalorder %s360, %s376
      %p378 = scmp.eq.s32.totalorder %s28, 0
      %p379 = por %p377, %p378
      %s380 = ssub.s32 %s29, %s41
      %p381 = scmp.eq.s32.totalorder %s380, 0
      %s383 = sadd.s32 %s382, 1
      %s384 = scalar_select %p381, %s382, %s383
      %p387 = pneg %p381
      %p388 = scmp.eq.s32.totalorder %s22, 3
      %p389 = por %p387, %p388
      %p390 = scmp.ne.s32.totalorder %s382, %s385
      %p391 = scmp.eq.s32.totalorder %s22, 0
      %p392 = por %p390, %p391
      %p393 = scmp.ne.s32.totalorder %s382, %s385
      %p394 = scmp.eq.s32.totalorder %s27, 3
      %p395 = por %p393, %p394
      %p396 = scmp.ne.s32.totalorder %s385, %s386
      %p397 = scmp.eq.s32.totalorder %s27, 0
      %p398 = por %p396, %p397
      %p399 = scmp.ne.s32.totalorder %s385, %s386
      %p400 = scmp.eq.s32.totalorder %s28, 3
      %p401 = por %p399, %p400
      %p403 = scmp.ne.s32.totalorder %s386, %s402
      %p404 = scmp.eq.s32.totalorder %s28, 0
      %p405 = por %p403, %p404
      %p406 = scmp.le.s32.totalorder 1, %s22
      %p407 = scmp.lt.s32.totalorder %s22, 5
      %p408 = pnand %p406, %p407
      %p409 = pneg %p408
      // Predicated region
      $region9: #{temporal_transformer_encoder.1} parent=5 // pred_check
        _
      $region10: #{temporal_transformer_encoder.1} parent=5 // pred_check_branch
        %411 = sbr.rel (%p408) target = $region12
      $region11: #{temporal_transformer_encoder.1} parent=5 // pred_region
        %s412 = ssub.s32 %s22, 1
      $region12: #{temporal_transformer_encoder.1} parent=5 // pred_fallthru
        _
      %p413 = scmp.lt.s32.totalorder %s22, 4
      // Predicated region
      $region13: #{temporal_transformer_encoder.1} parent=5 // pred_check
        %p414 = pneg %p413
      $region14: #{temporal_transformer_encoder.1} parent=5 // pred_check_branch
        %416 = sbr.rel (%p414) target = $region16
      $region15: #{temporal_transformer_encoder.1} parent=5 // pred_region
        // Predicated region
        $region17: #{temporal_transformer_encoder.1} parent=15 // pred_check
          %p417 = pneg %p54
        $region18: #{temporal_transformer_encoder.1} parent=15 // pred_check_branch
          %419 = sbr.rel (%p417) target = $region20
        $region19: #{temporal_transformer_encoder.1} parent=15 // pred_region
          %p420 = scmp.lt.s32.totalorder %s29, 1
          %s421 = scalar_select %p420, %s29, 1
          %s422 = smul.addr %s421, 8
          %s423 = scalar_lea.vmem %s0, %s422
        $region20: #{temporal_transformer_encoder.1} parent=15 // pred_fallthru
          _
        // Predicated region
        $region21: #{temporal_transformer_encoder.1} parent=15 // pred_check
          %p424 = pneg %p80
        $region22: #{temporal_transformer_encoder.1} parent=15 // pred_check_branch
          %426 = sbr.rel (%p424) target = $region24
        $region23: #{temporal_transformer_encoder.1} parent=15 // pred_region
          %p427 = scmp.lt.s32.totalorder %s30, 1
          %s428 = scalar_select %p427, %s30, 1
          %s429 = smul.addr %s428, 4
          %s430 = smul.addr %s429, 4
          %s431 = scalar_lea.vmem %s1, %s430
        $region24: #{temporal_transformer_encoder.1} parent=15 // pred_fallthru
          _
        // Predicated region
        $region25: #{temporal_transformer_encoder.1} parent=15 // pred_check
          %p432 = pneg %p106
        $region26: #{temporal_transformer_encoder.1} parent=15 // pred_check_branch
          %434 = sbr.rel (%p432) target = $region28
        $region27: #{temporal_transformer_encoder.1} parent=15 // pred_region
          %p435 = scmp.lt.s32.totalorder %s30, 1
          %s436 = scalar_select %p435, %s30, 1
          %s437 = scalar_lea.vmem %s2, %s436
        $region28: #{temporal_transformer_encoder.1} parent=15 // pred_fallthru
          _
        // Predicated region
        $region29: #{temporal_transformer_encoder.1} parent=15 // pred_check
          %p438 = pneg %p132
        $region30: #{temporal_transformer_encoder.1} parent=15 // pred_check_branch
          %440 = sbr.rel (%p438) target = $region32
        $region31: #{temporal_transformer_encoder.1} parent=15 // pred_region
          %p441 = scmp.lt.s32.totalorder %s30, 1
          %s442 = scalar_select %p441, %s30, 1
          %s443 = smul.addr %s442, 4
          %s444 = smul.addr %s443, 4
          %s445 = scalar_lea.vmem %s3, %s444
        $region32: #{temporal_transformer_encoder.1} parent=15 // pred_fallthru
          _
        // Predicated region
        $region33: #{temporal_transformer_encoder.1} parent=15 // pred_check
          %p446 = pneg %p158
        $region34: #{temporal_transformer_encoder.1} parent=15 // pred_check_branch
          %448 = sbr.rel (%p446) target = $region36
        $region35: #{temporal_transformer_encoder.1} parent=15 // pred_region
          %p449 = scmp.lt.s32.totalorder %s30, 1
          %s450 = scalar_select %p449, %s30, 1
          %s451 = scalar_lea.vmem %s4, %s450
        $region36: #{temporal_transformer_encoder.1} parent=15 // pred_fallthru
          _
        // Predicated region
        $region37: #{temporal_transformer_encoder.1} parent=15 // pred_check
          %p452 = pneg %p184
        $region38: #{temporal_transformer_encoder.1} parent=15 // pred_check_branch
          %454 = sbr.rel (%p452) target = $region40
        $region39: #{temporal_transformer_encoder.1} parent=15 // pred_region
          %p455 = scmp.lt.s32.totalorder %s30, 1
          %s456 = scalar_select %p455, %s30, 1
          %s457 = smul.addr %s456, 4
          %s458 = smul.addr %s457, 4
          %s459 = scalar_lea.vmem %s5, %s458
        $region40: #{temporal_transformer_encoder.1} parent=15 // pred_fallthru
          _
        // Predicated region
        $region41: #{temporal_transformer_encoder.1} parent=15 // pred_check
          %p460 = pneg %p210
        $region42: #{temporal_transformer_encoder.1} parent=15 // pred_check_branch
          %462 = sbr.rel (%p460) target = $region44
        $region43: #{temporal_transformer_encoder.1} parent=15 // pred_region
          %p463 = scmp.lt.s32.totalorder %s30, 1
          %s464 = scalar_select %p463, %s30, 1
          %s465 = scalar_lea.vmem %s6, %s464
        $region44: #{temporal_transformer_encoder.1} parent=15 // pred_fallthru
          _
        // Predicated region
        $region45: #{temporal_transformer_encoder.1} parent=15 // pred_check
          %p466 = pneg %p236
        $region46: #{temporal_transformer_encoder.1} parent=15 // pred_check_branch
          %468 = sbr.rel (%p466) target = $region48
        $region47: #{temporal_transformer_encoder.1} parent=15 // pred_region
          %p469 = scmp.lt.s32.totalorder %s30, 1
          %s470 = scalar_select %p469, %s30, 1
          %s471 = smul.addr %s470, 8
          %s472 = smul.addr %s471, 4
          %s473 = scalar_lea.vmem %s7, %s472
        $region48: #{temporal_transformer_encoder.1} parent=15 // pred_fallthru
          _
        // Predicated region
        $region49: #{temporal_transformer_encoder.1} parent=15 // pred_check
          %p474 = pneg %p262
        $region50: #{temporal_transformer_encoder.1} parent=15 // pred_check_branch
          %476 = sbr.rel (%p474) target = $region52
        $region51: #{temporal_transformer_encoder.1} parent=15 // pred_region
          %p477 = scmp.lt.s32.totalorder %s30, 1
          %s478 = scalar_select %p477, %s30, 1
          %s479 = scalar_lea.vmem %s8, %s478
        $region52: #{temporal_transformer_encoder.1} parent=15 // pred_fallthru
          _
        // Predicated region
        $region53: #{temporal_transformer_encoder.1} parent=15 // pred_check
          %p480 = pneg %p288
        $region54: #{temporal_transformer_encoder.1} parent=15 // pred_check_branch
          %482 = sbr.rel (%p480) target = $region56
        $region55: #{temporal_transformer_encoder.1} parent=15 // pred_region
          %p483 = scmp.lt.s32.totalorder %s30, 1
          %s484 = scalar_select %p483, %s30, 1
          %s485 = scalar_lea.vmem %s9, %s484
        $region56: #{temporal_transformer_encoder.1} parent=15 // pred_fallthru
          _
        // Predicated region
        $region57: #{temporal_transformer_encoder.1} parent=15 // pred_check
          %p486 = pneg %p314
        $region58: #{temporal_transformer_encoder.1} parent=15 // pred_check_branch
          %488 = sbr.rel (%p486) target = $region60
        $region59: #{temporal_transformer_encoder.1} parent=15 // pred_region
          %p489 = scmp.lt.s32.totalorder %s30, 1
          %s490 = scalar_select %p489, %s30, 1
          %s491 = scalar_lea.vmem %s10, %s490
        $region60: #{temporal_transformer_encoder.1} parent=15 // pred_fallthru
          _
        // Predicated region
        $region61: #{temporal_transformer_encoder.1} parent=15 // pred_check
          %p492 = pneg %p340
        $region62: #{temporal_transformer_encoder.1} parent=15 // pred_check_branch
          %494 = sbr.rel (%p492) target = $region64
        $region63: #{temporal_transformer_encoder.1} parent=15 // pred_region
          %p495 = scmp.lt.s32.totalorder %s30, 1
          %s496 = scalar_select %p495, %s30, 1
          %s497 = scalar_lea.vmem %s11, %s496
        $region64: #{temporal_transformer_encoder.1} parent=15 // pred_fallthru
          _
        // Predicated region
        $region65: #{temporal_transformer_encoder.1} parent=15 // pred_check
          %p498 = pneg %p366
        $region66: #{temporal_transformer_encoder.1} parent=15 // pred_check_branch
          %500 = sbr.rel (%p498) target = $region68
        $region67: #{temporal_transformer_encoder.1} parent=15 // pred_region
          %p501 = scmp.lt.s32.totalorder %s30, 1
          %s502 = scalar_select %p501, %s30, 1
          %s503 = scalar_lea.vmem %s12, %s502
        $region68: #{temporal_transformer_encoder.1} parent=15 // pred_fallthru
          _
      $region16: #{temporal_transformer_encoder.1} parent=5 // pred_fallthru
        _
      %p504 = scmp.le.s32.totalorder 1, %s22
      %p505 = scmp.lt.s32.totalorder %s22, 5
      %p506 = pnand %p504, %p505
      %p507 = pneg %p506
      // Predicated region
      $region69: #{temporal_transformer_encoder.1} parent=5 // pred_check
        _
      $region70: #{temporal_transformer_encoder.1} parent=5 // pred_check_branch
        %509 = sbr.rel (%p506) target = $region72
      $region71: #{temporal_transformer_encoder.1} parent=5 // pred_region
        %s510 = ssub.s32 %s22, 1
        %p511 = scmp.lt.s32.totalorder %s31, 1
        %s512 = scalar_select %p511, %s31, 1
        %s513 = smul.addr %s512, 8
        %s514 = scalar_lea.vmem %s0, %s513
        %p515 = pneg %p60
        %p516 = pneg %p57
        %p517 = scmp.lt.s32.totalorder %s32, 1
        %s518 = scalar_select %p517, %s32, 1
        %s519 = smul.addr %s518, 4
        %s520 = smul.addr %s519, 4
        %s521 = scalar_lea.vmem %s1, %s520
        %p522 = pneg %p86
        %p523 = pneg %p83
        %p524 = scmp.lt.s32.totalorder %s32, 1
        %s525 = scalar_select %p524, %s32, 1
        %s526 = scalar_lea.vmem %s2, %s525
        %p527 = pneg %p112
        %p528 = pneg %p109
        %p529 = scmp.lt.s32.totalorder %s32, 1
        %s530 = scalar_select %p529, %s32, 1
        %s531 = smul.addr %s530, 4
        %s532 = smul.addr %s531, 4
        %s533 = scalar_lea.vmem %s3, %s532
        %p534 = pneg %p138
        %p535 = pneg %p135
        %p536 = scmp.lt.s32.totalorder %s32, 1
        %s537 = scalar_select %p536, %s32, 1
        %s538 = scalar_lea.vmem %s4, %s537
        %p539 = pneg %p164
        %p540 = pneg %p161
        %p541 = scmp.lt.s32.totalorder %s32, 1
        %s542 = scalar_select %p541, %s32, 1
        %s543 = smul.addr %s542, 4
        %s544 = smul.addr %s543, 4
        %s545 = scalar_lea.vmem %s5, %s544
        %p546 = pneg %p190
        %p547 = pneg %p187
        %p548 = scmp.lt.s32.totalorder %s32, 1
        %s549 = scalar_select %p548, %s32, 1
        %s550 = scalar_lea.vmem %s6, %s549
        %p551 = pneg %p216
        %p552 = pneg %p213
        %p553 = scmp.lt.s32.totalorder %s32, 1
        %s554 = scalar_select %p553, %s32, 1
        %s555 = smul.addr %s554, 8
        %s556 = smul.addr %s555, 4
        %s557 = scalar_lea.vmem %s7, %s556
        %p558 = pneg %p242
        %p559 = pneg %p239
        %p560 = scmp.lt.s32.totalorder %s32, 1
        %s561 = scalar_select %p560, %s32, 1
        %s562 = scalar_lea.vmem %s8, %s561
        %p563 = pneg %p268
        %p564 = pneg %p265
        %p565 = scmp.lt.s32.totalorder %s32, 1
        %s566 = scalar_select %p565, %s32, 1
        %s567 = scalar_lea.vmem %s9, %s566
        %p568 = pneg %p294
        %p569 = pneg %p291
        %p570 = scmp.lt.s32.totalorder %s32, 1
        %s571 = scalar_select %p570, %s32, 1
        %s572 = scalar_lea.vmem %s10, %s571
        %p573 = pneg %p320
        %p574 = pneg %p317
        %p575 = scmp.lt.s32.totalorder %s32, 1
        %s576 = scalar_select %p575, %s32, 1
        %s577 = scalar_lea.vmem %s11, %s576
        %p578 = pneg %p346
        %p579 = pneg %p343
        %p580 = scmp.lt.s32.totalorder %s32, 1
        %s581 = scalar_select %p580, %s32, 1
        %s582 = scalar_lea.vmem %s12, %s581
        %p583 = pneg %p372
        %p584 = pneg %p369
        %p585 = pneg %p398
        %p586 = pneg %p395
        %s587 = sand.u32 %s385, 1
        %s588 = scalar_lea.sflag [#allocation3], %s587
        %s589 = sand.u32 %s385, 1
        %s590 = smul.addr %s589, 8
        %s591 = scalar_lea.vmem [#allocation2], %s590
        %p592 = scmp.lt.s32.totalorder %s31, 1
        %s593 = scalar_select %p592, %s31, 1
        %s594 = smul.addr %s593, 8
        %s595 = scalar_lea.vmem %s0, %s594
        %p596 = scmp.lt.s32.totalorder %s32, 1
        %s597 = scalar_select %p596, %s32, 1
        %s598 = smul.addr %s597, 4
        %s599 = smul.addr %s598, 4
        %s600 = scalar_lea.vmem %s1, %s599
        %p601 = scmp.lt.s32.totalorder %s32, 1
        %s602 = scalar_select %p601, %s32, 1
        %s603 = scalar_lea.vmem %s2, %s602
        %p604 = scmp.lt.s32.totalorder %s32, 1
        %s605 = scalar_select %p604, %s32, 1
        %s606 = smul.addr %s605, 4
        %s607 = smul.addr %s606, 4
        %s608 = scalar_lea.vmem %s3, %s607
        %p609 = scmp.lt.s32.totalorder %s32, 1
        %s610 = scalar_select %p609, %s32, 1
        %s611 = scalar_lea.vmem %s4, %s610
        %p612 = scmp.lt.s32.totalorder %s32, 1
        %s613 = scalar_select %p612, %s32, 1
        %s614 = smul.addr %s613, 4
        %s615 = smul.addr %s614, 4
        %s616 = scalar_lea.vmem %s5, %s615
        %p617 = scmp.lt.s32.totalorder %s32, 1
        %s618 = scalar_select %p617, %s32, 1
        %s619 = scalar_lea.vmem %s6, %s618
        %p620 = scmp.lt.s32.totalorder %s32, 1
        %s621 = scalar_select %p620, %s32, 1
        %s622 = smul.addr %s621, 8
        %s623 = smul.addr %s622, 4
        %s624 = scalar_lea.vmem %s7, %s623
        %p625 = scmp.lt.s32.totalorder %s32, 1
        %s626 = scalar_select %p625, %s32, 1
        %s627 = scalar_lea.vmem %s8, %s626
        %p628 = scmp.lt.s32.totalorder %s32, 1
        %s629 = scalar_select %p628, %s32, 1
        %s630 = scalar_lea.vmem %s9, %s629
        %p631 = scmp.lt.s32.totalorder %s32, 1
        %s632 = scalar_select %p631, %s32, 1
        %s633 = scalar_lea.vmem %s10, %s632
        %p634 = scmp.lt.s32.totalorder %s32, 1
        %s635 = scalar_select %p634, %s32, 1
        %s636 = scalar_lea.vmem %s11, %s635
        %p637 = scmp.lt.s32.totalorder %s32, 1
        %s638 = scalar_select %p637, %s32, 1
        %s639 = scalar_lea.vmem %s12, %s638
        %p641 = scmp.eq.s32.totalorder %s32, 0
        // Predicated region
        $region73: #{temporal_transformer_encoder.1} parent=71 // pred_check
          %p642 = pneg %p641
        $region74: #{temporal_transformer_encoder.1} parent=71 // pred_check_branch
          %644 = sbr.rel (%p642) target = $region76
        $region75: #{temporal_transformer_encoder.1} parent=71 // pred_region
          %v645 = vld [vmem:[%s595] sm:$0xff]
          %vm646 = vcmask 261120
          %647 = vst.msk [vmem:[%s591] sm:$0xff] %vm646, %v645
        $region76: #{temporal_transformer_encoder.1} parent=71 // pred_fallthru
          _
        %v648 = vld [vmem:[%s591] sm:$0xff]
        %v649 = vpack.c.bf16 %v648, %v648
        %v650 = vld [vmem:[%s600] sm:$0xf]
        %v651 = vld [vmem:[%s600 + $0x4] sm:$0xf]
        %v652 = vld [vmem:[%s600 + $0x8] sm:$0xf]
        %v653 = vld [vmem:[%s600 + $0xc] sm:$0xf]
        %v654 = vld [vmem:[%s603] sm:$0x1]
        %v656 = vperm.slane %v654, 0
        %v662 = vunpack.c.l.b16 %v650
        %v663 = vunpack.c.l.b16 %v651
        %v664 = vunpack.c.l.b16 %v652
        %v665 = vunpack.c.l.b16 %v653
        %v666 = vpack.c.b16 %v663, %v662
        %v667 = vpack.c.b16 %v665, %v664
        %vm670 = vcmask 261120
        %v672 = vsel %vm670, %v649, 0
        %674 = vmatpush.bf16.msra.mxu0 0
        %675 = vmatpush.bf16.msra.mxu0 0
        %676 = vmatpush.bf16.msra.mxu0 0
        %677 = vmatpush.bf16.msra.mxu0 0
        %678 = vmatpush.bf16.msra.mxu0 0
        %679 = vmatpush.bf16.msra.mxu0 0
        %680 = vmatpush.bf16.msra.mxu0 %v667
        %681 = vmatpush.bf16.msra.mxu0 %v666
        %682 = vmatmul.bf16.gmra.mxu0 %v672
        %v683 = vpop.f32.mrf.mxu0
        %v684 = vadd.f32 %v656, %v683
        %v685 = vpop.f32.mrf.mxu0
        %686 = vdwg.mxu0
        %v687 = vmul.f32 %v684, 0.35355338
        %v688 = vpack.c.bf16 %v687, %v687
        %v689 = vpack.c.bf16 %v684, %v684
        %691 = vrot.lane.b32.xlu0 %v689, 96
        %v692 = vpop.permute.xlu0 %691
        %vm693 = vcmask 64512
        %v695 = vsel %vm693, %v688, 0
        %v698 = vsel %vm693, %v692, 0
        %700 = vmatpush.bf16.xpose.msra.mxu0 0
        %701 = vmatpush.bf16.xpose.msra.mxu0 0
        %702 = vmatpush.bf16.xpose.msra.mxu0 0
        %703 = vmatpush.bf16.xpose.msra.mxu0 0
        %704 = vmatpush.bf16.xpose.msra.mxu0 0
        %705 = vmatpush.bf16.xpose.msra.mxu0 0
        %706 = vmatpush.bf16.xpose.msra.mxu0 0
        %707 = vmatpush.bf16.xpose.msra.mxu0 %v698
        %708 = vmatmul.bf16.gmra.mxu0 %v695
        %v709 = vpop.f32.mrf.mxu0
        %v710 = vadd.f32 0.0, %v709
        %v711 = vpop.f32.mrf.mxu0
        %712 = vdwg.mxu0
        %v713 = vsel %vm693, %v710, -inf
        %714 = vmax.xlane.f32.xlu0 %v713
        %v715 = vpop.xlane.xlu0 %714
        %v716 = vsub.f32 %v710, %v715
        %v717 = vmul.f32 %v716, 1.442695
        %v718 = vpow.pop %v717
        %v719 = vsel %vm693, %v718, 0.0
        %720 = vadd.xlane.f32.xlu0 %v719
        %v721 = vpop.xlane.xlu0 %720
        %v722 = vrcp.pop %v721
        %v723 = vmul.f32 %v718, %v722
        %v724 = vpack.c.bf16 %v723, %v723
        %725 = vrot.lane.b32.xlu0 %v689, 64
        %v726 = vpop.permute.xlu0 %725
        %v728 = vsel %vm693, %v724, 0
        %vm730 = vcmask 1043456
        %v732 = vsel %vm730, %v726, 0
        %734 = vmatpush.bf16.msra.mxu0 0
        %735 = vmatpush.bf16.msra.mxu0 0
        %736 = vmatpush.bf16.msra.mxu0 0
        %737 = vmatpush.bf16.msra.mxu0 0
        %738 = vmatpush.bf16.msra.mxu0 0
        %739 = vmatpush.bf16.msra.mxu0 0
        %740 = vmatpush.bf16.msra.mxu0 0
        %741 = vmatpush.bf16.msra.mxu0 %v732
        %742 = vmatmul.bf16.gmra.mxu0 %v728
        %v743 = vpop.f32.mrf.mxu0
        %v744 = vadd.f32 0.0, %v743
        %v745 = vpop.f32.mrf.mxu0
        %746 = vdwg.mxu0
        %748 = vrot.lane.b32.xlu0 %v688, 120
        %v749 = vpop.permute.xlu0 %748
        %750 = vrot.lane.b32.xlu0 %v689, 88
        %v751 = vpop.permute.xlu0 %750
        %v753 = vsel %vm693, %v749, 0
        %v756 = vsel %vm693, %v751, 0
        %758 = vmatpush.bf16.xpose.msra.mxu0 0
        %759 = vmatpush.bf16.xpose.msra.mxu0 0
        %760 = vmatpush.bf16.xpose.msra.mxu0 0
        %761 = vmatpush.bf16.xpose.msra.mxu0 0
        %762 = vmatpush.bf16.xpose.msra.mxu0 0
        %763 = vmatpush.bf16.xpose.msra.mxu0 0
        %764 = vmatpush.bf16.xpose.msra.mxu0 0
        %765 = vmatpush.bf16.xpose.msra.mxu0 %v756
        %766 = vmatmul.bf16.gmra.mxu0 %v753
        %v767 = vpop.f32.mrf.mxu0
        %v768 = vadd.f32 0.0, %v767
        %v769 = vpop.f32.mrf.mxu0
        %770 = vdwg.mxu0
        %v771 = vsel %vm693, %v768, -inf
        %772 = vmax.xlane.f32.xlu0 %v771
        %v773 = vpop.xlane.xlu0 %772
        %v774 = vsub.f32 %v768, %v773
        %v775 = vmul.f32 %v774, 1.442695
        %v776 = vpow.pop %v775
        %v777 = vsel %vm693, %v776, 0.0
        %778 = vadd.xlane.f32.xlu0 %v777
        %v779 = vpop.xlane.xlu0 %778
        %v780 = vrcp.pop %v779
        %v781 = vmul.f32 %v776, %v780
        %v782 = vpack.c.bf16 %v781, %v781
        %783 = vrot.lane.b32.xlu0 %v689, 56
        %v784 = vpop.permute.xlu0 %783
        %v786 = vsel %vm693, %v782, 0
        %v789 = vsel %vm730, %v784, 0
        %791 = vmatpush.bf16.msra.mxu0 0
        %792 = vmatpush.bf16.msra.mxu0 0
        %793 = vmatpush.bf16.msra.mxu0 0
        %794 = vmatpush.bf16.msra.mxu0 0
        %795 = vmatpush.bf16.msra.mxu0 0
        %796 = vmatpush.bf16.msra.mxu0 0
        %797 = vmatpush.bf16.msra.mxu0 0
        %798 = vmatpush.bf16.msra.mxu0 %v789
        %799 = vmatmul.bf16.gmra.mxu0 %v786
        %v800 = vpop.f32.mrf.mxu0
        %v801 = vadd.f32 0.0, %v800
        %v802 = vpop.f32.mrf.mxu0
        %803 = vdwg.mxu0
        %804 = vrot.lane.b32.xlu0 %v688, 112
        %v805 = vpop.permute.xlu0 %804
        %806 = vrot.lane.b32.xlu0 %v689, 80
        %v807 = vpop.permute.xlu0 %806
        %v809 = vsel %vm693, %v805, 0
        %v812 = vsel %vm693, %v807, 0
        %814 = vmatpush.bf16.xpose.msra.mxu0 0
        %815 = vmatpush.bf16.xpose.msra.mxu0 0
        %816 = vmatpush.bf16.xpose.msra.mxu0 0
        %817 = vmatpush.bf16.xpose.msra.mxu0 0
        %818 = vmatpush.bf16.xpose.msra.mxu0 0
        %819 = vmatpush.bf16.xpose.msra.mxu0 0
        %820 = vmatpush.bf16.xpose.msra.mxu0 0
        %821 = vmatpush.bf16.xpose.msra.mxu0 %v812
        %822 = vmatmul.bf16.gmra.mxu0 %v809
        %v823 = vpop.f32.mrf.mxu0
        %v824 = vadd.f32 0.0, %v823
        %v825 = vpop.f32.mrf.mxu0
        %826 = vdwg.mxu0
        %v827 = vsel %vm693, %v824, -inf
        %828 = vmax.xlane.f32.xlu0 %v827
        %v829 = vpop.xlane.xlu0 %828
        %v830 = vsub.f32 %v824, %v829
        %v831 = vmul.f32 %v830, 1.442695
        %v832 = vpow.pop %v831
        %v833 = vsel %vm693, %v832, 0.0
        %834 = vadd.xlane.f32.xlu0 %v833
        %v835 = vpop.xlane.xlu0 %834
        %v836 = vrcp.pop %v835
        %v837 = vmul.f32 %v832, %v836
        %v838 = vpack.c.bf16 %v837, %v837
        %839 = vrot.lane.b32.xlu0 %v689, 48
        %v840 = vpop.permute.xlu0 %839
        %v842 = vsel %vm693, %v838, 0
        %v845 = vsel %vm730, %v840, 0
        %847 = vmatpush.bf16.msra.mxu0 0
        %848 = vmatpush.bf16.msra.mxu0 0
        %849 = vmatpush.bf16.msra.mxu0 0
        %850 = vmatpush.bf16.msra.mxu0 0
        %851 = vmatpush.bf16.msra.mxu0 0
        %852 = vmatpush.bf16.msra.mxu0 0
        %853 = vmatpush.bf16.msra.mxu0 0
        %854 = vmatpush.bf16.msra.mxu0 %v845
        %855 = vmatmul.bf16.gmra.mxu0 %v842
        %v856 = vpop.f32.mrf.mxu0
        %v857 = vadd.f32 0.0, %v856
        %v858 = vpop.f32.mrf.mxu0
        %859 = vdwg.mxu0
        %860 = vrot.lane.b32.xlu0 %v688, 104
        %v861 = vpop.permute.xlu0 %860
        %862 = vrot.lane.b32.xlu0 %v689, 72
        %v863 = vpop.permute.xlu0 %862
        %v865 = vsel %vm693, %v861, 0
        %v868 = vsel %vm693, %v863, 0
        %870 = vmatpush.bf16.xpose.msra.mxu0 0
        %871 = vmatpush.bf16.xpose.msra.mxu0 0
        %872 = vmatpush.bf16.xpose.msra.mxu0 0
        %873 = vmatpush.bf16.xpose.msra.mxu0 0
        %874 = vmatpush.bf16.xpose.msra.mxu0 0
        %875 = vmatpush.bf16.xpose.msra.mxu0 0
        %876 = vmatpush.bf16.xpose.msra.mxu0 0
        %877 = vmatpush.bf16.xpose.msra.mxu0 %v868
        %878 = vmatmul.bf16.gmra.mxu0 %v865
        %v879 = vpop.f32.mrf.mxu0
        %v880 = vadd.f32 0.0, %v879
        %v881 = vpop.f32.mrf.mxu0
        %882 = vdwg.mxu0
        %v883 = vsel %vm693, %v880, -inf
        %884 = vmax.xlane.f32.xlu0 %v883
        %v885 = vpop.xlane.xlu0 %884
        %v886 = vsub.f32 %v880, %v885
        %v887 = vmul.f32 %v886, 1.442695
        %v888 = vpow.pop %v887
        %v889 = vsel %vm693, %v888, 0.0
        %890 = vadd.xlane.f32.xlu0 %v889
        %v891 = vpop.xlane.xlu0 %890
        %v892 = vrcp.pop %v891
        %v893 = vmul.f32 %v888, %v892
        %v894 = vpack.c.bf16 %v893, %v893
        %895 = vrot.lane.b32.xlu0 %v689, 40
        %v896 = vpop.permute.xlu0 %895
        %v898 = vsel %vm693, %v894, 0
        %v901 = vsel %vm730, %v896, 0
        %903 = vmatpush.bf16.msra.mxu0 0
        %904 = vmatpush.bf16.msra.mxu0 0
        %905 = vmatpush.bf16.msra.mxu0 0
        %906 = vmatpush.bf16.msra.mxu0 0
        %907 = vmatpush.bf16.msra.mxu0 0
        %908 = vmatpush.bf16.msra.mxu0 0
        %909 = vmatpush.bf16.msra.mxu0 0
        %910 = vmatpush.bf16.msra.mxu0 %v901
        %911 = vmatmul.bf16.gmra.mxu0 %v898
        %v912 = vpop.f32.mrf.mxu0
        %v913 = vadd.f32 0.0, %v912
        %v914 = vpop.f32.mrf.mxu0
        %915 = vdwg.mxu0
        %917 = vrot.lane.b32.xlu0 %v801, 8
        %v918 = vpop.permute.xlu0 %917
        %921 = vrot.lane.b32.xlu0 %v857, 16
        %v922 = vpop.permute.xlu0 %921
        %925 = vrot.lane.b32.xlu0 %v913, 24
        %v926 = vpop.permute.xlu0 %925
        %v928 = vsel %vm693, %v744, %v918
        %vm929 = vcmask 130048
        %v930 = vsel %vm929, %v928, %v922
        %vm931 = vcmask 195584
        %v932 = vsel %vm931, %v930, %v926
        %v933 = vpack.c.bf16 %v932, %v932
        %v934 = vld [vmem:[%s608] sm:$0xf]
        %v935 = vld [vmem:[%s608 + $0x4] sm:$0xf]
        %v936 = vld [vmem:[%s608 + $0x8] sm:$0xf]
        %v937 = vld [vmem:[%s608 + $0xc] sm:$0xf]
        %v938 = vld [vmem:[%s611] sm:$0x1]
        %v940 = vperm.slane %v938, 0
        %v946 = vunpack.c.l.b16 %v934
        %v947 = vunpack.c.l.b16 %v935
        %v948 = vunpack.c.l.b16 %v936
        %v949 = vunpack.c.l.b16 %v937
        %v950 = vpack.c.b16 %v947, %v946
        %v951 = vpack.c.b16 %v949, %v948
        %v955 = vsel %vm670, %v933, 0
        %957 = vmatpush.bf16.msra.mxu0 0
        %958 = vmatpush.bf16.msra.mxu0 0
        %959 = vmatpush.bf16.msra.mxu0 0
        %960 = vmatpush.bf16.msra.mxu0 0
        %961 = vmatpush.bf16.msra.mxu0 0
        %962 = vmatpush.bf16.msra.mxu0 0
        %963 = vmatpush.bf16.msra.mxu0 %v951
        %964 = vmatpush.bf16.msra.mxu0 %v950
        %965 = vmatmul.bf16.gmra.mxu0 %v955
        %v966 = vpop.f32.mrf.mxu0
        %v967 = vadd.f32 %v940, %v966
        %v968 = vpop.f32.mrf.mxu0
        %969 = vdwg.mxu0
        %v970 = vadd.f32 %v648, %v967
        %v971 = vld [vmem:[%s630] sm:$0x1]
        %v972 = vld [vmem:[%s633] sm:$0x1]
        %v973 = vsel %vm670, %v970, 0.0
        %974 = vadd.xlane.f32.xlu0 %v973
        %v975 = vpop.xlane.xlu0 %974
        %v976 = vrcp.pop 32.0
        %v977 = vmul.f32 32.0, %v976
        %v978 = vsub.f32 1.0, %v977
        %v979 = vmul.f32 %v976, %v978
        %v980 = vadd.f32 %v976, %v979
        %vm981 = vweird.f32 %v976
        %v982 = vsel %vm981, %v976, %v980
        %v983 = vmul.f32 %v975, %v982
        %v984 = vsub.f32 %v970, %v983
        %v985 = vmul.f32 %v984, %v984
        %v986 = vsel %vm670, %v985, 0.0
        %987 = vadd.xlane.f32.xlu0 %v986
        %v988 = vpop.xlane.xlu0 %987
        %v989 = vmul.f32 %v988, %v982
        %v990 = vadd.f32 %v989, 1e-05
        %v991 = vrsqrt.pop %v990
        %v992 = vmul.f32 %v991, %v990
        %v993 = vmul.f32 %v992, %v991
        %v994 = vmul.f32 0.5, %v993
        %v995 = vsub.f32 1.5, %v994
        %v996 = vmul.f32 %v991, %v995
        %vm997 = vweird.f32 %v990
        %vm998 = vweird.f32 %v991
        %vm999 = vmor %vm997, %vm998
        %v1000 = vsel %vm999, %v991, %v996
        %v1001 = vmul.f32 %v984, %v1000
        %v1003 = vperm.slane %v971, 0
        %v1005 = vmul.f32 %v1001, %v1003
        %v1007 = vperm.slane %v972, 0
        %v1009 = vadd.f32 %v1005, %v1007
        %v1010 = vpack.c.bf16 %v1009, %v1009
        %v1011 = vld [vmem:[%s616] sm:$0xf]
        %v1012 = vld [vmem:[%s616 + $0x4] sm:$0xf]
        %v1013 = vld [vmem:[%s616 + $0x8] sm:$0xf]
        %v1014 = vld [vmem:[%s616 + $0xc] sm:$0xf]
        %v1015 = vld [vmem:[%s619] sm:$0x1]
        %v1017 = vperm.slane %v1015, 0
        %v1023 = vunpack.c.l.b16 %v1011
        %v1024 = vunpack.c.l.b16 %v1012
        %v1025 = vunpack.c.l.b16 %v1013
        %v1026 = vunpack.c.l.b16 %v1014
        %v1027 = vpack.c.b16 %v1024, %v1023
        %v1028 = vpack.c.b16 %v1026, %v1025
        %v1032 = vsel %vm670, %v1010, 0
        %1034 = vmatpush.bf16.msra.mxu0 0
        %1035 = vmatpush.bf16.msra.mxu0 0
        %1036 = vmatpush.bf16.msra.mxu0 0
        %1037 = vmatpush.bf16.msra.mxu0 0
        %1038 = vmatpush.bf16.msra.mxu0 0
        %1039 = vmatpush.bf16.msra.mxu0 0
        %1040 = vmatpush.bf16.msra.mxu0 %v1028
        %1041 = vmatpush.bf16.msra.mxu0 %v1027
        %1042 = vmatmul.bf16.gmra.mxu0 %v1032
        %v1043 = vpop.f32.mrf.mxu0
        %v1044 = vadd.f32 %v1017, %v1043
        %v1045 = vpop.f32.mrf.mxu0
        %1046 = vdwg.mxu0
        %v1047 = vmax.f32 %v1044, 0.0
        %v1048 = vpack.c.bf16 %v1047, %v1047
        %v1049 = vld [vmem:[%s624] sm:$0xf]
        %v1050 = vld [vmem:[%s624 + $0x4] sm:$0xf]
        %v1051 = vld [vmem:[%s624 + $0x8] sm:$0xf]
        %v1052 = vld [vmem:[%s624 + $0xc] sm:$0xf]
        %v1053 = vld [vmem:[%s624 + $0x10] sm:$0xf]
        %v1054 = vld [vmem:[%s624 + $0x14] sm:$0xf]
        %v1055 = vld [vmem:[%s624 + $0x18] sm:$0xf]
        %v1056 = vld [vmem:[%s624 + $0x1c] sm:$0xf]
        %v1057 = vld [vmem:[%s627] sm:$0x1]
        %v1059 = vperm.slane %v1057, 0
        %v1069 = vunpack.c.l.b16 %v1049
        %v1070 = vunpack.c.l.b16 %v1050
        %v1071 = vunpack.c.l.b16 %v1051
        %v1072 = vunpack.c.l.b16 %v1052
        %v1073 = vunpack.c.l.b16 %v1053
        %v1074 = vunpack.c.l.b16 %v1054
        %v1075 = vunpack.c.l.b16 %v1055
        %v1076 = vunpack.c.l.b16 %v1056
        %v1077 = vpack.c.b16 %v1070, %v1069
        %v1078 = vpack.c.b16 %v1072, %v1071
        %v1079 = vpack.c.b16 %v1074, %v1073
        %v1080 = vpack.c.b16 %v1076, %v1075
        %vm1085 = vcmask 523264
        %v1087 = vsel %vm1085, %v1048, 0
        %1089 = vmatpush.bf16.msra.mxu0 0
        %1090 = vmatpush.bf16.msra.mxu0 0
        %1091 = vmatpush.bf16.msra.mxu0 0
        %1092 = vmatpush.bf16.msra.mxu0 0
        %1093 = vmatpush.bf16.msra.mxu0 %v1080
        %1094 = vmatpush.bf16.msra.mxu0 %v1079
        %1095 = vmatpush.bf16.msra.mxu0 %v1078
        %1096 = vmatpush.bf16.msra.mxu0 %v1077
        %1097 = vmatmul.bf16.gmra.mxu0 %v1087
        %v1098 = vpop.f32.mrf.mxu0
        %v1099 = vadd.f32 %v1059, %v1098
        %v1100 = vpop.f32.mrf.mxu0
        %1101 = vdwg.mxu0
        %v1102 = vadd.f32 %v1009, %v1099
        %v1103 = vld [vmem:[%s636] sm:$0x1]
        %v1104 = vld [vmem:[%s639] sm:$0x1]
        %v1105 = vsel %vm670, %v1102, 0.0
        %1106 = vadd.xlane.f32.xlu0 %v1105
        %v1107 = vpop.xlane.xlu0 %1106
        %v1108 = vmul.f32 %v1107, %v982
        %v1109 = vsub.f32 %v1102, %v1108
        %v1110 = vmul.f32 %v1109, %v1109
        %v1111 = vsel %vm670, %v1110, 0.0
        %1112 = vadd.xlane.f32.xlu0 %v1111
        %v1113 = vpop.xlane.xlu0 %1112
        %v1114 = vmul.f32 %v1113, %v982
        %v1115 = vadd.f32 %v1114, 1e-05
        %v1116 = vrsqrt.pop %v1115
        %v1117 = vmul.f32 %v1116, %v1115
        %v1118 = vmul.f32 %v1117, %v1116
        %v1119 = vmul.f32 0.5, %v1118
        %v1120 = vsub.f32 1.5, %v1119
        %v1121 = vmul.f32 %v1116, %v1120
        %vm1122 = vweird.f32 %v1115
        %vm1123 = vweird.f32 %v1116
        %vm1124 = vmor %vm1122, %vm1123
        %v1125 = vsel %vm1124, %v1116, %v1121
        %v1126 = vmul.f32 %v1109, %v1125
        %v1128 = vperm.slane %v1103, 0
        %v1130 = vmul.f32 %v1126, %v1128
        %v1132 = vperm.slane %v1104, 0
        %v1134 = vadd.f32 %v1130, %v1132
        %1135 = vst.msk [vmem:[%s591] sm:$0xff] %vm670, %v1134
        %s1136 = sand.u32 %s385, 1
        %s1137 = scalar_lea.sflag [#allocation3], %s1136
        %s1138 = sand.u32 %s385, 1
        %s1139 = smul.addr %s1138, 8
        %s1140 = scalar_lea.vmem [#allocation2], %s1139
        // Predicated region
        $region77: #{temporal_transformer_encoder.1} parent=71 // pred_check
          %p1141 = pneg %p395
        $region78: #{temporal_transformer_encoder.1} parent=71 // pred_check_branch
          %1143 = sbr.rel (%p1141) target = $region80
        $region79: #{temporal_transformer_encoder.1} parent=71 // pred_region
          %1145 = vsyncadd %s1137, 0
          %s1146 = smul.addr %s31, 8
          %s1147 = scalar_lea.hbm %s13, %s1146
          %s1149 = sshll.u32 %s1140, 4
          %s1150 = int_to_ptr.vmem [resolvable:$true] %s1149
          %s1151 = sshll.u32 %s1147, 4
          %s1152 = int_to_ptr.hbm [resolvable:$true] %s1151
          %1154 = dma.vmem_to_hbm [thread:$0]  %s1150, 128, %s1152, %s1137
        $region80: #{temporal_transformer_encoder.1} parent=71 // pred_fallthru
          _
      $region72: #{temporal_transformer_encoder.1} parent=5 // pred_fallthru
        _
      %p1155 = scmp.le.s32.totalorder 2, %s22
      // Predicated region
      $region81: #{temporal_transformer_encoder.1} parent=5 // pred_check
        %p1156 = pneg %p1155
      $region82: #{temporal_transformer_encoder.1} parent=5 // pred_check_branch
        %1158 = sbr.rel (%p1156) target = $region84
      $region83: #{temporal_transformer_encoder.1} parent=5 // pred_region
        %s1159 = ssub.s32 %s22, 2
        // Predicated region
        $region85: #{temporal_transformer_encoder.1} parent=83 // pred_check
          %p1160 = pneg %p401
        $region86: #{temporal_transformer_encoder.1} parent=83 // pred_check_branch
          %1162 = sbr.rel (%p1160) target = $region88
        $region87: #{temporal_transformer_encoder.1} parent=83 // pred_region
          %s1163 = sand.u32 %s386, 1
          %s1164 = scalar_lea.sflag [#allocation3], %s1163
          %s1165 = sand.u32 %s386, 1
          %s1166 = smul.addr %s1165, 8
          %s1167 = scalar_lea.vmem [#allocation2], %s1166
          %1169 = dma.done %s1164, 128
        $region88: #{temporal_transformer_encoder.1} parent=83 // pred_fallthru
          _
      $region84: #{temporal_transformer_encoder.1} parent=5 // pred_fallthru
        _
    $region6: #{temporal_transformer_encoder.1} parent=1 // loop_footer
      %s26 = sadd.s32 1, %s22
    $region7: #{temporal_transformer_encoder.1} parent=1 // loop_footer_branch
      %21 = sbr.rel target = $region3
    $region8: #{temporal_transformer_encoder.1} parent=1 // loop_exit
      _
    %1170 = vsyncpa [#allocation3], 1
    %s1171 = scalar_lea.sflag [#allocation3], 1
    %1172 = vsyncpa %s1171, 1

</llo_original>
